<compile_context>
chip_gen: v5e
topology: v5e:2x2
jax: 0.10.0
libtpu: 0.0.40
codegen_flags: <defaults>
</compile_context>

<pallas_src>
import functools

import jax
import jax.numpy as jnp
from jax import lax
from jax.experimental import pallas as pl
from jax.experimental.pallas import tpu as pltpu


# ---------------------------------------------------------------------------
# HarDBlock wiring (pure Python, mirrors the PyTorch get_link exactly).
# ---------------------------------------------------------------------------
def get_link(layer, base_ch, growth_rate, grmul):
    if layer == 0:
        return base_ch, 0, []
    out_channels = growth_rate
    link = []
    for i in range(10):
        dv = 2 ** i
        if layer % dv == 0:
            k = layer - dv
            link.append(k)
            if i > 0:
                out_channels *= grmul
    out_channels = int(int(out_channels + 1) / 2) * 2
    in_channels = 0
    for i in link:
        ch, _, _ = get_link(i, base_ch, growth_rate, grmul)
        in_channels += ch
    return out_channels, in_channels, link


def _round_up(x, m):
    return (x + m - 1) // m * m


def _pick_tile_h(h, w, c_in, c_out_p, max_tile_h=None,
                 budget_bytes=24 * 1024 * 1024):
    """Largest divisor of h whose double-buffered strip working set fits."""
    wp = w + 2
    for th in range(h, 0, -1):
        if h % th:
            continue
        if max_tile_h is not None and th > max_tile_h:
            continue
        in_b = 2 * (th + 2) * wp * c_in * 4          # f32 input strip, 2 bufs
        out_b = 2 * th * w * c_out_p * 4             # f32 output strip, 2 bufs
        wgt_b = 2 * (9 * c_in * c_out_p * 2 + c_out_p * 4)   # bf16 w + f32 bias
        acc_b = th * w * c_out_p * 4                 # f32 scratch accumulator
        if in_b + out_b + wgt_b + acc_b <= budget_bytes:
            return th
    return 1


# ---------------------------------------------------------------------------
# Pallas kernel: 3x3 conv (pad=1, stride=1) + folded-BN bias + ReLU,
# computed on one pre-padded row strip of one batch element.
# ---------------------------------------------------------------------------
def _conv3x3_bias_relu_kernel(x_ref, w_ref, b_ref, o_ref, acc_ref,
                              *, th, w, c_in, c_out_p):
    # x_ref  : (1, TH+2, W+2, C_in)  pre-padded NHWC row strip (with halo)
    # w_ref  : (9, C_in, C_out_p)    bf16 tap-major (dy*3+dx) weights, BN folded
    # b_ref  : (1, C_out_p)          f32 folded BN bias
    # o_ref  : (1, TH*W, C_out_p)    flat strip output, lane-dense (128-mult)
    # acc_ref: (TH*W, C_out_p)       f32 VMEM accumulator
    acc_ref[...] = jnp.zeros_like(acc_ref)
    xb = x_ref[0].astype(jnp.bfloat16)                      # single cast pass
    for tap in range(9):                    # static unroll: 9 large-M matmuls
        dy, dx = tap // 3, tap % 3
        xs = xb[dy:dy + th, dx:dx + w, :].reshape(th * w, c_in)
        acc_ref[...] += jnp.dot(xs, w_ref[tap],
                                preferred_element_type=jnp.float32)
    o_ref[0] = jnp.maximum(acc_ref[...] + b_ref[...], 0.0).astype(o_ref.dtype)


def conv3x3_bn_relu(x_nhwc, w9, bias_p, c_out, *, max_tile_h=None):
    """ConvLayer (conv3x3 + inference BN + ReLU) on NHWC input via Pallas."""
    n, h, w, c_in = x_nhwc.shape
    c_out_p = w9.shape[-1]                       # already padded to 128-mult
    th = _pick_tile_h(h, w, c_in, c_out_p, max_tile_h)
    s = h // th
    wp = w + 2

    # Spatial "same" padding + block-aligned overlapping row strips (only the
    # 2 halo rows per strip are duplicated).  XLA glue, outside the kernel.
    x_pad = jnp.pad(x_nhwc, ((0, 0), (1, 1), (1, 1), (0, 0)))
    if s == 1:
        x_strips = x_pad.reshape(n, 1, h + 2, wp, c_in)
    else:
        x_strips = jnp.stack(
            [x_pad[:, i * th:i * th + th + 2] for i in range(s)], axis=1)
    x_strips = x_strips.reshape(n * s, th + 2, wp, c_in)

    bias2d = bias_p.reshape(1, c_out_p).astype(jnp.float32)

    kernel = functools.partial(_conv3x3_bias_relu_kernel,
                               th=th, w=w, c_in=c_in, c_out_p=c_out_p)
    out = pl.pallas_call(
        kernel,
        out_shape=jax.ShapeDtypeStruct((n * s, th * w, c_out_p), x_nhwc.dtype),
        grid_spec=pltpu.PrefetchScalarGridSpec(
            num_scalar_prefetch=0,
            grid=(n * s,),                        # batch*strip, fully parallel
            in_specs=[
                pl.BlockSpec((1, th + 2, wp, c_in), lambda i: (i, 0, 0, 0)),
                pl.BlockSpec((9, c_in, c_out_p), lambda i: (0, 0, 0)),
                pl.BlockSpec((1, c_out_p), lambda i: (0, 0)),
            ],
            out_specs=pl.BlockSpec((1, th * w, c_out_p), lambda i: (i, 0, 0)),
            scratch_shapes=[pltpu.VMEM((th * w, c_out_p), jnp.float32)],
        ),
        compiler_params=pltpu.CompilerParams(
            dimension_semantics=("parallel",),
            vmem_limit_bytes=48 * 1024 * 1024,    # > 32 MiB default, v7x-safe
        ),
    )(x_strips, w9, bias2d)

    # (N*S, TH*W, Cp) -> (N, H, W, Cp), then drop the lane padding in XLA.
    out = out.reshape(n, h, w, c_out_p)
    return out[..., :c_out]


# ---------------------------------------------------------------------------
# HarDBlock module (JAX/Pallas), inference-mode BatchNorm.
# ---------------------------------------------------------------------------
class HarDBlockPallas:
    def __init__(self, in_channels, growth_rate, grmul, n_layers,
                 keepBase=False, *, key, dtype=jnp.float32, eps=1e-5,
                 max_tile_h=None):
        self.keepBase = keepBase
        self.eps = eps
        self.max_tile_h = max_tile_h
        self.links = []
        self.layer_channels = []
        self.out_channels = 0
        for i in range(n_layers):
            outch, inch, link = get_link(i + 1, in_channels, growth_rate, grmul)
            self.links.append(link)
            self.layer_channels.append((inch, outch))
            if i % 2 == 0 or i == n_layers - 1:
                self.out_channels += outch

        # Random parameters (conv weight + BatchNorm gamma/beta/running stats).
        self.params = []
        self.folded = []      # (w9_bf16_padded, bias_f32_padded, true_c_out)
        keys = jax.random.split(key, n_layers)
        for l, (inch, outch) in enumerate(self.layer_channels):
            kw, kg, kb, km, kv = jax.random.split(keys[l], 5)
            wgt = (0.1 * jax.random.normal(kw, (outch, inch, 3, 3))).astype(dtype)
            gamma = jax.random.uniform(kg, (outch,), dtype, 0.5, 1.5)
            beta = (0.1 * jax.random.normal(kb, (outch,))).astype(dtype)
            mean = (0.1 * jax.random.normal(km, (outch,))).astype(dtype)
            var = jax.random.uniform(kv, (outch,), dtype, 0.5, 1.5)
            self.params.append(dict(w=wgt, gamma=gamma, beta=beta, mean=mean, var=var))

            # Fold inference BatchNorm into the conv weight / bias (once, XLA):
            #   y = relu(conv(x, w*scale) + (beta - mean*scale))
            scale = gamma / jnp.sqrt(var + eps)
            bias = beta - mean * scale
            w9 = jnp.transpose(wgt, (2, 3, 1, 0)).reshape(9, inch, outch)
            w9 = w9 * scale[None, None, :]
            # Lane-dense C_out: zero-pad weights/bias up to a 128-multiple so
            # the kernel's stores are unmasked; padding is sliced off in XLA.
            c_out_p = _round_up(outch, 128)
            w9_p = jnp.zeros((9, inch, c_out_p), jnp.float32).at[..., :outch].set(w9)
            b_p = jnp.zeros((c_out_p,), jnp.float32).at[:outch].set(bias)
            self.folded.append((w9_p.astype(jnp.bfloat16), b_p, outch))
        # TODO(synk): training-mode BatchNorm (batch statistics + running-stat
        # update) is not implemented; this matches PyTorch .eval() semantics.
        # TODO(synk): channel-concat of linked layers is still an XLA concat;
        # fusing it as per-source matmuls into the kernel would need manual
        # per-source halo DMA and is left out of this version.

    def __call__(self, x_nchw):
        # NCHW -> NHWC once (channels on the lane axis); concats stay in XLA.
        layers_ = [jnp.transpose(x_nchw, (0, 2, 3, 1))]
        for l, link in enumerate(self.links):
            tin = [layers_[i] for i in link]
            xin = jnp.concatenate(tin, axis=-1) if len(tin) > 1 else tin[0]
            w9, bias, outch = self.folded[l]
            layers_.append(conv3x3_bn_relu(xin, w9, bias, outch,
                                           max_tile_h=self.max_tile_h))
        t = len(layers_)
        out_ = [layers_[i] for i in range(t)
                if (i == 0 and self.keepBase) or i == t - 1 or i % 2 == 1]
        out = jnp.concatenate(out_, axis=-1)
        return jnp.transpose(out, (0, 3, 1, 2))      # back to NCHW


# ---------------------------------------------------------------------------
# Pure-JAX reference (NCHW, lax.conv) for correctness checking.
# ---------------------------------------------------------------------------
def _reference_hardblock(block, x_nchw):
    layers_ = [x_nchw]
    for l, link in enumerate(block.links):
        tin = [layers_[i] for i in link]
        xin = jnp.concatenate(tin, axis=1) if len(tin) > 1 else tin[0]
        p = block.params[l]
        y = lax.conv_general_dilated(
            xin, p["w"], window_strides=(1, 1), padding="SAME",
            dimension_numbers=("NCHW", "OIHW", "NCHW"))
        scale = p["gamma"] / jnp.sqrt(p["var"] + block.eps)
        bias = p["beta"] - p["mean"] * scale
        y = jnp.maximum(y * scale[None, :, None, None] + bias[None, :, None, None], 0.0)
        layers_.append(y.astype(x_nchw.dtype))
    t = len(layers_)
    out_ = [layers_[i] for i in range(t)
            if (i == 0 and block.keepBase) or i == t - 1 or i % 2 == 1]
    return jnp.concatenate(out_, axis=1)


if __name__ == "__main__":
    key = jax.random.PRNGKey(0)
    kx, kp = jax.random.split(key)

    # HarDBlock(in_channels=4, growth_rate=6, grmul=1.7, n_layers=4)
    # max_tile_h=8 exercises the row-strip grid (2 strips of the 16-row image).
    block = HarDBlockPallas(in_channels=4, growth_rate=6, grmul=1.7,
                            n_layers=4, keepBase=False, key=kp, max_tile_h=8)
    x = jax.random.normal(kx, (2, 4, 16, 16), dtype=jnp.float32)

    out = jax.block_until_ready(block(x))
    assert out.shape == (2, block.out_channels, 16, 16), out.shape

    ref = _reference_hardblock(block, x)
    max_err = float(jnp.max(jnp.abs(out - ref)))
    # bf16 MXU operands / folded-bf16 weights vs the f32 reference conv.
    assert jnp.allclose(out, ref, atol=5e-2, rtol=5e-2), f"mismatch vs ref: {max_err}"

    print("KERNEL_OK")
</pallas_src>

<mosaic_0001>
module attributes {stable_mosaic.version = 11 : i64} {
  func.func @_conv3x3_bias_relu_kernel(%arg0: i32, %arg1: memref<1x10x18x4xf32, #tpu.memory_space<vmem>>, %arg2: memref<9x4x128xbf16, #tpu.memory_space<vmem>>, %arg3: memref<1x128xf32, #tpu.memory_space<vmem>>, %arg4: memref<1x128x128xf32, #tpu.memory_space<vmem>>, %arg5: memref<128x128xf32, #tpu.memory_space<vmem>>) attributes {dimension_semantics = [#tpu.dimension_semantics<parallel>], iteration_bounds = array<i64: 4>, scalar_prefetch = 0 : i64, scratch_operands = 1 : i64, tpu.core_type = #tpu.core_type<tc>, window_params = [{transform_indices = @transform_0, window_bounds = array<i64: 1, 10, 18, 4>}, {pipeline_mode = #tpu.pipeline_mode<synchronous>, transform_indices = @transform_1, window_bounds = array<i64: 9, 4, 128>}, {pipeline_mode = #tpu.pipeline_mode<synchronous>, transform_indices = @transform_2, window_bounds = array<i64: 1, 128>}, {transform_indices = @transform_3, window_bounds = array<i64: 1, 128, 128>}]} {
    %cst = arith.constant 0.000000e+00 : f32
    %0 = vector.broadcast %cst : f32 to vector<128x128xf32>
    %c0 = arith.constant 0 : index
    %c0_0 = arith.constant 0 : index
    %1 = vector.load %arg5[%c0, %c0_0] : memref<128x128xf32, #tpu.memory_space<vmem>>, vector<128x128xf32>
    tpu.vector_store %arg5[%c0, %c0_0], %0 {strides = array<i32>} : memref<128x128xf32, #tpu.memory_space<vmem>>, vector<128x128xf32>,
    %c0_1 = arith.constant 0 : index
    %c0_2 = arith.constant 0 : index
    %c0_3 = arith.constant 0 : index
    %c0_4 = arith.constant 0 : index
    %2 = vector.load %arg1[%c0_1, %c0_2, %c0_3, %c0_4] : memref<1x10x18x4xf32, #tpu.memory_space<vmem>>, vector<1x10x18x4xf32>
    %3 = vector.shape_cast %2 : vector<1x10x18x4xf32> to vector<10x18x4xf32>
    %4 = arith.truncf %3 : vector<10x18x4xf32> to vector<10x18x4xbf16>
    %5 = vector.extract_strided_slice %4 {offsets = [0, 0, 0], sizes = [8, 16, 4], strides = [1, 1, 1]} : vector<10x18x4xbf16> to vector<8x16x4xbf16>
    %6 = vector.shape_cast %5 : vector<8x16x4xbf16> to vector<128x4xbf16>
    %c0_5 = arith.constant 0 : index
    %c0_6 = arith.constant 0 : index
    %7 = vector.load %arg5[%c0_5, %c0_6] : memref<128x128xf32, #tpu.memory_space<vmem>>, vector<128x128xf32>
    %c0_7 = arith.constant 0 : index
    %c0_8 = arith.constant 0 : index
    %c0_9 = arith.constant 0 : index
    %8 = vector.load %arg2[%c0_7, %c0_8, %c0_9] : memref<9x4x128xbf16, #tpu.memory_space<vmem>>, vector<1x4x128xbf16>
    %9 = vector.shape_cast %8 : vector<1x4x128xbf16> to vector<4x128xbf16>
    %cst_10 = arith.constant dense<0.000000e+00> : vector<128x128xf32>
    %10 = tpu.matmul %6, %9, %cst_10 {dimension_numbers = #tpu.dot_dimension_numbers<[1], [0], [0], [1], [0, 0, 1, 1], [], []>} : vector<128x4xbf16>, vector<4x128xbf16>, vector<128x128xf32> -> vector<128x128xf32>
    %11 = arith.addf %7, %10 : vector<128x128xf32>
    %c0_11 = arith.constant 0 : index
    %c0_12 = arith.constant 0 : index
    %12 = vector.load %arg5[%c0_11, %c0_12] : memref<128x128xf32, #tpu.memory_space<vmem>>, vector<128x128xf32>
    tpu.vector_store %arg5[%c0_11, %c0_12], %11 {strides = array<i32>} : memref<128x128xf32, #tpu.memory_space<vmem>>, vector<128x128xf32>,
    %13 = vector.extract_strided_slice %4 {offsets = [0, 1, 0], sizes = [8, 16, 4], strides = [1, 1, 1]} : vector<10x18x4xbf16> to vector<8x16x4xbf16>
    %14 = vector.shape_cast %13 : vector<8x16x4xbf16> to vector<128x4xbf16>
    %c0_13 = arith.constant 0 : index
    %c0_14 = arith.constant 0 : index
    %15 = vector.load %arg5[%c0_13, %c0_14] : memref<128x128xf32, #tpu.memory_space<vmem>>, vector<128x128xf32>
    %c1 = arith.constant 1 : index
    %c0_15 = arith.constant 0 : index
    %c0_16 = arith.constant 0 : index
    %16 = vector.load %arg2[%c1, %c0_15, %c0_16] : memref<9x4x128xbf16, #tpu.memory_space<vmem>>, vector<1x4x128xbf16>
    %17 = vector.shape_cast %16 : vector<1x4x128xbf16> to vector<4x128xbf16>
    %cst_17 = arith.constant dense<0.000000e+00> : vector<128x128xf32>
    %18 = tpu.matmul %14, %17, %cst_17 {dimension_numbers = #tpu.dot_dimension_numbers<[1], [0], [0], [1], [0, 0, 1, 1], [], []>} : vector<128x4xbf16>, vector<4x128xbf16>, vector<128x128xf32> -> vector<128x128xf32>
    %19 = arith.addf %15, %18 : vector<128x128xf32>
    %c0_18 = arith.constant 0 : index
    %c0_19 = arith.constant 0 : index
    %20 = vector.load %arg5[%c0_18, %c0_19] : memref<128x128xf32, #tpu.memory_space<vmem>>, vector<128x128xf32>
    tpu.vector_store %arg5[%c0_18, %c0_19], %19 {strides = array<i32>} : memref<128x128xf32, #tpu.memory_space<vmem>>, vector<128x128xf32>,
    %21 = vector.extract_strided_slice %4 {offsets = [0, 2, 0], sizes = [8, 16, 4], strides = [1, 1, 1]} : vector<10x18x4xbf16> to vector<8x16x4xbf16>
    %22 = vector.shape_cast %21 : vector<8x16x4xbf16> to vector<128x4xbf16>
    %c0_20 = arith.constant 0 : index
    %c0_21 = arith.constant 0 : index
    %23 = vector.load %arg5[%c0_20, %c0_21] : memref<128x128xf32, #tpu.memory_space<vmem>>, vector<128x128xf32>
    %c2 = arith.constant 2 : index
    %c0_22 = arith.constant 0 : index
    %c0_23 = arith.constant 0 : index
    %24 = vector.load %arg2[%c2, %c0_22, %c0_23] : memref<9x4x128xbf16, #tpu.memory_space<vmem>>, vector<1x4x128xbf16>
    %25 = vector.shape_cast %24 : vector<1x4x128xbf16> to vector<4x128xbf16>
    %cst_24 = arith.constant dense<0.000000e+00> : vector<128x128xf32>
    %26 = tpu.matmul %22, %25, %cst_24 {dimension_numbers = #tpu.dot_dimension_numbers<[1], [0], [0], [1], [0, 0, 1, 1], [], []>} : vector<128x4xbf16>, vector<4x128xbf16>, vector<128x128xf32> -> vector<128x128xf32>
    %27 = arith.addf %23, %26 : vector<128x128xf32>
    %c0_25 = arith.constant 0 : index
    %c0_26 = arith.constant 0 : index
    %28 = vector.load %arg5[%c0_25, %c0_26] : memref<128x128xf32, #tpu.memory_space<vmem>>, vector<128x128xf32>
    tpu.vector_store %arg5[%c0_25, %c0_26], %27 {strides = array<i32>} : memref<128x128xf32, #tpu.memory_space<vmem>>, vector<128x128xf32>,
    %29 = vector.extract_strided_slice %4 {offsets = [1, 0, 0], sizes = [8, 16, 4], strides = [1, 1, 1]} : vector<10x18x4xbf16> to vector<8x16x4xbf16>
    %30 = vector.shape_cast %29 : vector<8x16x4xbf16> to vector<128x4xbf16>
    %c0_27 = arith.constant 0 : index
    %c0_28 = arith.constant 0 : index
    %31 = vector.load %arg5[%c0_27, %c0_28] : memref<128x128xf32, #tpu.memory_space<vmem>>, vector<128x128xf32>
    %c3 = arith.constant 3 : index
    %c0_29 = arith.constant 0 : index
    %c0_30 = arith.constant 0 : index
    %32 = vector.load %arg2[%c3, %c0_29, %c0_30] : memref<9x4x128xbf16, #tpu.memory_space<vmem>>, vector<1x4x128xbf16>
    %33 = vector.shape_cast %32 : vector<1x4x128xbf16> to vector<4x128xbf16>
    %cst_31 = arith.constant dense<0.000000e+00> : vector<128x128xf32>
    %34 = tpu.matmul %30, %33, %cst_31 {dimension_numbers = #tpu.dot_dimension_numbers<[1], [0], [0], [1], [0, 0, 1, 1], [], []>} : vector<128x4xbf16>, vector<4x128xbf16>, vector<128x128xf32> -> vector<128x128xf32>
    %35 = arith.addf %31, %34 : vector<128x128xf32>
    %c0_32 = arith.constant 0 : index
    %c0_33 = arith.constant 0 : index
    %36 = vector.load %arg5[%c0_32, %c0_33] : memref<128x128xf32, #tpu.memory_space<vmem>>, vector<128x128xf32>
    tpu.vector_store %arg5[%c0_32, %c0_33], %35 {strides = array<i32>} : memref<128x128xf32, #tpu.memory_space<vmem>>, vector<128x128xf32>,
    %37 = vector.extract_strided_slice %4 {offsets = [1, 1, 0], sizes = [8, 16, 4], strides = [1, 1, 1]} : vector<10x18x4xbf16> to vector<8x16x4xbf16>
    %38 = vector.shape_cast %37 : vector<8x16x4xbf16> to vector<128x4xbf16>
    %c0_34 = arith.constant 0 : index
    %c0_35 = arith.constant 0 : index
    %39 = vector.load %arg5[%c0_34, %c0_35] : memref<128x128xf32, #tpu.memory_space<vmem>>, vector<128x128xf32>
    %c4 = arith.constant 4 : index
    %c0_36 = arith.constant 0 : index
    %c0_37 = arith.constant 0 : index
    %40 = vector.load %arg2[%c4, %c0_36, %c0_37] : memref<9x4x128xbf16, #tpu.memory_space<vmem>>, vector<1x4x128xbf16>
    %41 = vector.shape_cast %40 : vector<1x4x128xbf16> to vector<4x128xbf16>
    %cst_38 = arith.constant dense<0.000000e+00> : vector<128x128xf32>
    %42 = tpu.matmul %38, %41, %cst_38 {dimension_numbers = #tpu.dot_dimension_numbers<[1], [0], [0], [1], [0, 0, 1, 1], [], []>} : vector<128x4xbf16>, vector<4x128xbf16>, vector<128x128xf32> -> vector<128x128xf32>
    %43 = arith.addf %39, %42 : vector<128x128xf32>
    %c0_39 = arith.constant 0 : index
    %c0_40 = arith.constant 0 : index
    %44 = vector.load %arg5[%c0_39, %c0_40] : memref<128x128xf32, #tpu.memory_space<vmem>>, vector<128x128xf32>
    tpu.vector_store %arg5[%c0_39, %c0_40], %43 {strides = array<i32>} : memref<128x128xf32, #tpu.memory_space<vmem>>, vector<128x128xf32>,
    %45 = vector.extract_strided_slice %4 {offsets = [1, 2, 0], sizes = [8, 16, 4], strides = [1, 1, 1]} : vector<10x18x4xbf16> to vector<8x16x4xbf16>
    %46 = vector.shape_cast %45 : vector<8x16x4xbf16> to vector<128x4xbf16>
    %c0_41 = arith.constant 0 : index
    %c0_42 = arith.constant 0 : index
    %47 = vector.load %arg5[%c0_41, %c0_42] : memref<128x128xf32, #tpu.memory_space<vmem>>, vector<128x128xf32>
    %c5 = arith.constant 5 : index
    %c0_43 = arith.constant 0 : index
    %c0_44 = arith.constant 0 : index
    %48 = vector.load %arg2[%c5, %c0_43, %c0_44] : memref<9x4x128xbf16, #tpu.memory_space<vmem>>, vector<1x4x128xbf16>
    %49 = vector.shape_cast %48 : vector<1x4x128xbf16> to vector<4x128xbf16>
    %cst_45 = arith.constant dense<0.000000e+00> : vector<128x128xf32>
    %50 = tpu.matmul %46, %49, %cst_45 {dimension_numbers = #tpu.dot_dimension_numbers<[1], [0], [0], [1], [0, 0, 1, 1], [], []>} : vector<128x4xbf16>, vector<4x128xbf16>, vector<128x128xf32> -> vector<128x128xf32>
    %51 = arith.addf %47, %50 : vector<128x128xf32>
    %c0_46 = arith.constant 0 : index
    %c0_47 = arith.constant 0 : index
    %52 = vector.load %arg5[%c0_46, %c0_47] : memref<128x128xf32, #tpu.memory_space<vmem>>, vector<128x128xf32>
    tpu.vector_store %arg5[%c0_46, %c0_47], %51 {strides = array<i32>} : memref<128x128xf32, #tpu.memory_space<vmem>>, vector<128x128xf32>,
    %53 = vector.extract_strided_slice %4 {offsets = [2, 0, 0], sizes = [8, 16, 4], strides = [1, 1, 1]} : vector<10x18x4xbf16> to vector<8x16x4xbf16>
    %54 = vector.shape_cast %53 : vector<8x16x4xbf16> to vector<128x4xbf16>
    %c0_48 = arith.constant 0 : index
    %c0_49 = arith.constant 0 : index
    %55 = vector.load %arg5[%c0_48, %c0_49] : memref<128x128xf32, #tpu.memory_space<vmem>>, vector<128x128xf32>
    %c6 = arith.constant 6 : index
    %c0_50 = arith.constant 0 : index
    %c0_51 = arith.constant 0 : index
    %56 = vector.load %arg2[%c6, %c0_50, %c0_51] : memref<9x4x128xbf16, #tpu.memory_space<vmem>>, vector<1x4x128xbf16>
    %57 = vector.shape_cast %56 : vector<1x4x128xbf16> to vector<4x128xbf16>
    %cst_52 = arith.constant dense<0.000000e+00> : vector<128x128xf32>
    %58 = tpu.matmul %54, %57, %cst_52 {dimension_numbers = #tpu.dot_dimension_numbers<[1], [0], [0], [1], [0, 0, 1, 1], [], []>} : vector<128x4xbf16>, vector<4x128xbf16>, vector<128x128xf32> -> vector<128x128xf32>
    %59 = arith.addf %55, %58 : vector<128x128xf32>
    %c0_53 = arith.constant 0 : index
    %c0_54 = arith.constant 0 : index
    %60 = vector.load %arg5[%c0_53, %c0_54] : memref<128x128xf32, #tpu.memory_space<vmem>>, vector<128x128xf32>
    tpu.vector_store %arg5[%c0_53, %c0_54], %59 {strides = array<i32>} : memref<128x128xf32, #tpu.memory_space<vmem>>, vector<128x128xf32>,
    %61 = vector.extract_strided_slice %4 {offsets = [2, 1, 0], sizes = [8, 16, 4], strides = [1, 1, 1]} : vector<10x18x4xbf16> to vector<8x16x4xbf16>
    %62 = vector.shape_cast %61 : vector<8x16x4xbf16> to vector<128x4xbf16>
    %c0_55 = arith.constant 0 : index
    %c0_56 = arith.constant 0 : index
    %63 = vector.load %arg5[%c0_55, %c0_56] : memref<128x128xf32, #tpu.memory_space<vmem>>, vector<128x128xf32>
    %c7 = arith.constant 7 : index
    %c0_57 = arith.constant 0 : index
    %c0_58 = arith.constant 0 : index
    %64 = vector.load %arg2[%c7, %c0_57, %c0_58] : memref<9x4x128xbf16, #tpu.memory_space<vmem>>, vector<1x4x128xbf16>
    %65 = vector.shape_cast %64 : vector<1x4x128xbf16> to vector<4x128xbf16>
    %cst_59 = arith.constant dense<0.000000e+00> : vector<128x128xf32>
    %66 = tpu.matmul %62, %65, %cst_59 {dimension_numbers = #tpu.dot_dimension_numbers<[1], [0], [0], [1], [0, 0, 1, 1], [], []>} : vector<128x4xbf16>, vector<4x128xbf16>, vector<128x128xf32> -> vector<128x128xf32>
    %67 = arith.addf %63, %66 : vector<128x128xf32>
    %c0_60 = arith.constant 0 : index
    %c0_61 = arith.constant 0 : index
    %68 = vector.load %arg5[%c0_60, %c0_61] : memref<128x128xf32, #tpu.memory_space<vmem>>, vector<128x128xf32>
    tpu.vector_store %arg5[%c0_60, %c0_61], %67 {strides = array<i32>} : memref<128x128xf32, #tpu.memory_space<vmem>>, vector<128x128xf32>,
    %69 = vector.extract_strided_slice %4 {offsets = [2, 2, 0], sizes = [8, 16, 4], strides = [1, 1, 1]} : vector<10x18x4xbf16> to vector<8x16x4xbf16>
    %70 = vector.shape_cast %69 : vector<8x16x4xbf16> to vector<128x4xbf16>
    %c0_62 = arith.constant 0 : index
    %c0_63 = arith.constant 0 : index
    %71 = vector.load %arg5[%c0_62, %c0_63] : memref<128x128xf32, #tpu.memory_space<vmem>>, vector<128x128xf32>
    %c8 = arith.constant 8 : index
    %c0_64 = arith.constant 0 : index
    %c0_65 = arith.constant 0 : index
    %72 = vector.load %arg2[%c8, %c0_64, %c0_65] : memref<9x4x128xbf16, #tpu.memory_space<vmem>>, vector<1x4x128xbf16>
    %73 = vector.shape_cast %72 : vector<1x4x128xbf16> to vector<4x128xbf16>
    %cst_66 = arith.constant dense<0.000000e+00> : vector<128x128xf32>
    %74 = tpu.matmul %70, %73, %cst_66 {dimension_numbers = #tpu.dot_dimension_numbers<[1], [0], [0], [1], [0, 0, 1, 1], [], []>} : vector<128x4xbf16>, vector<4x128xbf16>, vector<128x128xf32> -> vector<128x128xf32>
    %75 = arith.addf %71, %74 : vector<128x128xf32>
    %c0_67 = arith.constant 0 : index
    %c0_68 = arith.constant 0 : index
    %76 = vector.load %arg5[%c0_67, %c0_68] : memref<128x128xf32, #tpu.memory_space<vmem>>, vector<128x128xf32>
    tpu.vector_store %arg5[%c0_67, %c0_68], %75 {strides = array<i32>} : memref<128x128xf32, #tpu.memory_space<vmem>>, vector<128x128xf32>,
    %c0_69 = arith.constant 0 : index
    %c0_70 = arith.constant 0 : index
    %77 = vector.load %arg5[%c0_69, %c0_70] : memref<128x128xf32, #tpu.memory_space<vmem>>, vector<128x128xf32>
    %c0_71 = arith.constant 0 : index
    %c0_72 = arith.constant 0 : index
    %78 = vector.load %arg3[%c0_71, %c0_72] : memref<1x128xf32, #tpu.memory_space<vmem>>, vector<1x128xf32>
    %79 = vector.broadcast %78 : vector<1x128xf32> to vector<128x128xf32>
    %80 = arith.addf %77, %79 : vector<128x128xf32>
    %cst_73 = arith.constant 0.000000e+00 : f32
    %81 = vector.broadcast %cst_73 : f32 to vector<128x128xf32>
    %82 = arith.maximumf %80, %81 : vector<128x128xf32>
    %c0_74 = arith.constant 0 : index
    %c0_75 = arith.constant 0 : index
    %c0_76 = arith.constant 0 : index
    %83 = vector.load %arg4[%c0_74, %c0_75, %c0_76] : memref<1x128x128xf32, #tpu.memory_space<vmem>>, vector<1x128x128xf32>
    %84 = vector.shape_cast %83 : vector<1x128x128xf32> to vector<128x128xf32>
    %85 = vector.shape_cast %82 : vector<128x128xf32> to vector<1x128x128xf32>
    tpu.vector_store %arg4[%c0_74, %c0_75, %c0_76], %85 {strides = array<i32>} : memref<1x128x128xf32, #tpu.memory_space<vmem>>, vector<1x128x128xf32>,
    return
  }
  func.func @transform_0(%arg0: i32) -> (i32, i32, i32, i32) {
    %c0_i32 = arith.constant 0 : i32
    %c0_i32_0 = arith.constant 0 : i32
    %c0_i32_1 = arith.constant 0 : i32
    %c0_i32_2 = arith.constant 0 : i32
    return %arg0, %c0_i32, %c0_i32_0, %c0_i32_1 : i32, i32, i32, i32
  }
  func.func @transform_1(%arg0: i32) -> (i32, i32, i32) {
    %c0_i32 = arith.constant 0 : i32
    %c0_i32_0 = arith.constant 0 : i32
    %c0_i32_1 = arith.constant 0 : i32
    %c0_i32_2 = arith.constant 0 : i32
    return %c0_i32, %c0_i32_0, %c0_i32_1 : i32, i32, i32
  }
  func.func @transform_2(%arg0: i32) -> (i32, i32) {
    %c0_i32 = arith.constant 0 : i32
    %c0_i32_0 = arith.constant 0 : i32
    %c0_i32_1 = arith.constant 0 : i32
    return %c0_i32, %c0_i32_0 : i32, i32
  }
  func.func @transform_3(%arg0: i32) -> (i32, i32, i32) {
    %c0_i32 = arith.constant 0 : i32
    %c0_i32_0 = arith.constant 0 : i32
    %c0_i32_1 = arith.constant 0 : i32
    return %arg0, %c0_i32, %c0_i32_0 : i32, i32, i32
  }
}

</mosaic_0001>

<llo_original>
// kernel: tpu_custom_call.1
$region0: #{tpu_custom_call.1}
  #allocation0 [shape = 'u32[]', space=smem, size = 0x4, offset = 0x4, fixed_abs, tag = 'smem constant byte address 0x4 - core index']
  #allocation1 [shape = 'u32[72,128]{1,0:T(1,128)}', space=vmem, size = 0x9000, scoped, tag = 'internal scratch']
  #allocation2 [shape = 'f32[128,128]{1,0:T(8,128)}', space=vmem, size = 0x10000, scoped, tag = 'scratch operand']
  %s0 = inlined_call_operand.vmem [shape: f32[4,10,18,4], index: 0, kind: input, shape index: {}]
  %s1 = inlined_call_operand.vmem [shape: bf16[9,4,128], index: 1, kind: input, shape index: {}]
  %s2 = inlined_call_operand.vmem [shape: f32[1,128], index: 2, kind: input, shape index: {}]
  %s3 = inlined_call_operand.hbm [shape: f32[4,128,128], index: 3, kind: output, shape index: {}]
  %s4 = sld [smem:[#allocation0]]
  $region45: #{tpu_custom_call.1} parent=0
    _
  %s6 = ssub.s32 1, %s4
  %s7 = scalar_select 0, %s6, %s4
  $region1: #{tpu_custom_call.1} parent=0
    #allocation3 [shape = 'u8[131072]{0}', space=vmem, size = 0x20000, scoped, tag = 'output window, operand 0']
    #allocation4 [shape = 's32[2]{0}', space=sflag, size = 0x8, scoped, tag = 'scoped memory for tpu_custom_call.1']
    %8 = vsyncpa [#allocation4], 0
    %s9 = scalar_lea.sflag [#allocation4], 1
    %10 = vsyncpa %s9, 0
    loop: start=0, step=1, limit=6
    $region2: #{tpu_custom_call.1} parent=1 // loop_pre_header
      _
    $region3: #{tpu_custom_call.1} parent=1 // loop_header
      %s12 = sphi 0, %s16
      %p13 = scmp.ge.s32.totalorder %s12, 6
      %s22 = sphi 0, %s24
      %s25 = sphi 0, %s22
      %s26 = sphi 0, %s25
      %s42 = sphi 0, %s26
      %s46 = sphi 0, %s46
      %s48 = sphi 0, %s46
      %s49 = sphi 0, %s48
      %s63 = sphi 0, %s49
      %s67 = sphi 0, %s67
      %s69 = sphi 0, %s67
      %s70 = sphi 0, %s69
      %s84 = sphi 0, %s70
      %s90 = sphi 0, %s92
      %s93 = sphi 0, %s90
      %s94 = sphi 0, %s93
      %s110 = sphi 0, %s94
    $region4: #{tpu_custom_call.1} parent=1 // loop_header_branch
      %15 = sbr.rel (%p13) target = $region8
    $region5: #{tpu_custom_call.1} parent=1 // loop_body
      %s17 = ssub.s32 %s12, 1
      %s18 = ssub.s32 %s12, 2
      %s19 = sadd.s32 %s12, 1
      %s20 = ssub.s32 %s12, %s19
      %p21 = scmp.eq.s32.totalorder %s20, 0
      %s23 = sadd.s32 %s22, 1
      %s24 = scalar_select %p21, %s22, %s23
      %p27 = pneg %p21
      %p28 = scmp.eq.s32.totalorder %s12, 3
      %p29 = por %p27, %p28
      %p30 = scmp.ne.s32.totalorder %s22, %s25
      %p31 = scmp.eq.s32.totalorder %s12, 0
      %p32 = por %p30, %p31
      %p33 = scmp.ne.s32.totalorder %s22, %s25
      %p34 = scmp.eq.s32.totalorder %s17, 3
      %p35 = por %p33, %p34
      %p36 = scmp.ne.s32.totalorder %s25, %s26
      %p37 = scmp.eq.s32.totalorder %s17, 0
      %p38 = por %p36, %p37
      %p39 = scmp.ne.s32.totalorder %s25, %s26
      %p40 = scmp.eq.s32.totalorder %s18, 3
      %p41 = por %p39, %p40
      %p43 = scmp.ne.s32.totalorder %s26, %s42
      %p44 = scmp.eq.s32.totalorder %s18, 0
      %p45 = por %p43, %p44
      %s47 = sadd.s32 %s46, 1
      %p50 = scmp.eq.s32.totalorder %s12, 3
      %p51 = scmp.ne.s32.totalorder %s46, %s48
      %p52 = scmp.eq.s32.totalorder %s12, 0
      %p53 = por %p51, %p52
      %p54 = scmp.ne.s32.totalorder %s46, %s48
      %p55 = scmp.eq.s32.totalorder %s17, 3
      %p56 = por %p54, %p55
      %p57 = scmp.ne.s32.totalorder %s48, %s49
      %p58 = scmp.eq.s32.totalorder %s17, 0
      %p59 = por %p57, %p58
      %p60 = scmp.ne.s32.totalorder %s48, %s49
      %p61 = scmp.eq.s32.totalorder %s18, 3
      %p62 = por %p60, %p61
      %p64 = scmp.ne.s32.totalorder %s49, %s63
      %p65 = scmp.eq.s32.totalorder %s18, 0
      %p66 = por %p64, %p65
      %s68 = sadd.s32 %s67, 1
      %p71 = scmp.eq.s32.totalorder %s12, 3
      %p72 = scmp.ne.s32.totalorder %s67, %s69
      %p73 = scmp.eq.s32.totalorder %s12, 0
      %p74 = por %p72, %p73
      %p75 = scmp.ne.s32.totalorder %s67, %s69
      %p76 = scmp.eq.s32.totalorder %s17, 3
      %p77 = por %p75, %p76
      %p78 = scmp.ne.s32.totalorder %s69, %s70
      %p79 = scmp.eq.s32.totalorder %s17, 0
      %p80 = por %p78, %p79
      %p81 = scmp.ne.s32.totalorder %s69, %s70
      %p82 = scmp.eq.s32.totalorder %s18, 3
      %p83 = por %p81, %p82
      %p85 = scmp.ne.s32.totalorder %s70, %s84
      %p86 = scmp.eq.s32.totalorder %s18, 0
      %p87 = por %p85, %p86
      %s88 = ssub.s32 %s12, %s19
      %p89 = scmp.eq.s32.totalorder %s88, 0
      %s91 = sadd.s32 %s90, 1
      %s92 = scalar_select %p89, %s90, %s91
      %p95 = pneg %p89
      %p96 = scmp.eq.s32.totalorder %s12, 3
      %p97 = por %p95, %p96
      %p98 = scmp.ne.s32.totalorder %s90, %s93
      %p99 = scmp.eq.s32.totalorder %s12, 0
      %p100 = por %p98, %p99
      %p101 = scmp.ne.s32.totalorder %s90, %s93
      %p102 = scmp.eq.s32.totalorder %s17, 3
      %p103 = por %p101, %p102
      %p104 = scmp.ne.s32.totalorder %s93, %s94
      %p105 = scmp.eq.s32.totalorder %s17, 0
      %p106 = por %p104, %p105
      %p107 = scmp.ne.s32.totalorder %s93, %s94
      %p108 = scmp.eq.s32.totalorder %s18, 3
      %p109 = por %p107, %p108
      %p111 = scmp.ne.s32.totalorder %s94, %s110
      %p112 = scmp.eq.s32.totalorder %s18, 0
      %p113 = por %p111, %p112
      %p114 = scmp.le.s32.totalorder 1, %s12
      %p115 = scmp.lt.s32.totalorder %s12, 5
      %p116 = pnand %p114, %p115
      %p117 = pneg %p116
      // Predicated region
      $region9: #{tpu_custom_call.1} parent=5 // pred_check
        _
      $region10: #{tpu_custom_call.1} parent=5 // pred_check_branch
        %119 = sbr.rel (%p116) target = $region12
      $region11: #{tpu_custom_call.1} parent=5 // pred_region
        %s120 = ssub.s32 %s12, 1
        // Predicated region
        $region13: #{tpu_custom_call.1} parent=11 // pred_check
          %p121 = pneg %p59
        $region14: #{tpu_custom_call.1} parent=11 // pred_check_branch
          %123 = sbr.rel (%p121) target = $region16
        $region15: #{tpu_custom_call.1} parent=11 // pred_region
          _
        $region16: #{tpu_custom_call.1} parent=11 // pred_fallthru
          _
        // Predicated region
        $region17: #{tpu_custom_call.1} parent=11 // pred_check
          %p124 = pneg %p80
        $region18: #{tpu_custom_call.1} parent=11 // pred_check_branch
          %126 = sbr.rel (%p124) target = $region20
        $region19: #{tpu_custom_call.1} parent=11 // pred_region
          _
        $region20: #{tpu_custom_call.1} parent=11 // pred_fallthru
          _
      $region12: #{tpu_custom_call.1} parent=5 // pred_fallthru
        _
      %p127 = scmp.lt.s32.totalorder %s12, 4
      // Predicated region
      $region21: #{tpu_custom_call.1} parent=5 // pred_check
        %p128 = pneg %p127
      $region22: #{tpu_custom_call.1} parent=5 // pred_check_branch
        %130 = sbr.rel (%p128) target = $region24
      $region23: #{tpu_custom_call.1} parent=5 // pred_region
        // Predicated region
        $region25: #{tpu_custom_call.1} parent=23 // pred_check
          %p131 = pneg %p32
        $region26: #{tpu_custom_call.1} parent=23 // pred_check_branch
          %133 = sbr.rel (%p131) target = $region28
        $region27: #{tpu_custom_call.1} parent=23 // pred_region
          %p134 = scmp.lt.s32.totalorder %s12, 3
          %s135 = scalar_select %p134, %s12, 3
          %s136 = smul.addr %s135, 30
          %s137 = smul.addr %s136, 8
          %s138 = scalar_lea.vmem %s0, %s137
        $region28: #{tpu_custom_call.1} parent=23 // pred_fallthru
          _
      $region24: #{tpu_custom_call.1} parent=5 // pred_fallthru
        _
      %p139 = scmp.le.s32.totalorder 1, %s12
      %p140 = scmp.lt.s32.totalorder %s12, 5
      %p141 = pnand %p139, %p140
      %p142 = pneg %p141
      // Predicated region
      $region29: #{tpu_custom_call.1} parent=5 // pred_check
        _
      $region30: #{tpu_custom_call.1} parent=5 // pred_check_branch
        %144 = sbr.rel (%p141) target = $region32
      $region31: #{tpu_custom_call.1} parent=5 // pred_region
        %s145 = ssub.s32 %s12, 1
        %p146 = scmp.lt.s32.totalorder %s17, 3
        %s147 = scalar_select %p146, %s17, 3
        %s148 = smul.addr %s147, 30
        %s149 = smul.addr %s148, 8
        %s150 = scalar_lea.vmem %s0, %s149
        %p151 = pneg %p38
        %p152 = pneg %p35
        %p153 = pneg %p59
        %p154 = pneg %p56
        %p155 = pneg %p80
        %p156 = pneg %p77
        %p157 = pneg %p106
        %p158 = pneg %p103
        %s159 = sand.u32 %s93, 1
        %s160 = scalar_lea.sflag [#allocation4], %s159
        %s161 = sand.u32 %s93, 1
        %s162 = smul.addr %s161, 128
        %s163 = scalar_lea.vmem [#allocation3], %s162
        %p164 = scmp.lt.s32.totalorder %s17, 3
        %s165 = scalar_select %p164, %s17, 3
        %s166 = smul.addr %s165, 30
        %s167 = smul.addr %s166, 8
        %s168 = scalar_lea.vmem %s0, %s167
        %170 = vst [vmem:[#allocation2] sm:$0xff] 0.0
        %171 = vst [vmem:[#allocation2 + $0x8] sm:$0xff] 0.0
        %172 = vst [vmem:[#allocation2 + $0x10] sm:$0xff] 0.0
        %173 = vst [vmem:[#allocation2 + $0x18] sm:$0xff] 0.0
        %174 = vst [vmem:[#allocation2 + $0x20] sm:$0xff] 0.0
        %175 = vst [vmem:[#allocation2 + $0x28] sm:$0xff] 0.0
        %176 = vst [vmem:[#allocation2 + $0x30] sm:$0xff] 0.0
        %177 = vst [vmem:[#allocation2 + $0x38] sm:$0xff] 0.0
        %178 = vst [vmem:[#allocation2 + $0x40] sm:$0xff] 0.0
        %179 = vst [vmem:[#allocation2 + $0x48] sm:$0xff] 0.0
        %180 = vst [vmem:[#allocation2 + $0x50] sm:$0xff] 0.0
        %181 = vst [vmem:[#allocation2 + $0x58] sm:$0xff] 0.0
        %182 = vst [vmem:[#allocation2 + $0x60] sm:$0xff] 0.0
        %183 = vst [vmem:[#allocation2 + $0x68] sm:$0xff] 0.0
        %184 = vst [vmem:[#allocation2 + $0x70] sm:$0xff] 0.0
        %185 = vst [vmem:[#allocation2 + $0x78] sm:$0xff] 0.0
        %v186 = vld [vmem:[%s168] sm:$0xff]
        %v187 = vld [vmem:[%s168 + $0x8] sm:$0xff]
        %v188 = vld [vmem:[%s168 + $0x10] sm:$0x3]
        %v189 = vld [vmem:[%s168 + $0x18] sm:$0xff]
        %v190 = vld [vmem:[%s168 + $0x20] sm:$0xff]
        %v191 = vld [vmem:[%s168 + $0x28] sm:$0x3]
        %v192 = vld [vmem:[%s168 + $0x30] sm:$0xff]
        %v193 = vld [vmem:[%s168 + $0x38] sm:$0xff]
        %v194 = vld [vmem:[%s168 + $0x40] sm:$0x3]
        %v195 = vld [vmem:[%s168 + $0x48] sm:$0xff]
        %v196 = vld [vmem:[%s168 + $0x50] sm:$0xff]
        %v197 = vld [vmem:[%s168 + $0x58] sm:$0x3]
        %v198 = vld [vmem:[%s168 + $0x60] sm:$0xff]
        %v199 = vld [vmem:[%s168 + $0x68] sm:$0xff]
        %v200 = vld [vmem:[%s168 + $0x70] sm:$0x3]
        %v201 = vld [vmem:[%s168 + $0x78] sm:$0xff]
        %v202 = vld [vmem:[%s168 + $0x80] sm:$0xff]
        %v203 = vld [vmem:[%s168 + $0x88] sm:$0x3]
        %v204 = vld [vmem:[%s168 + $0x90] sm:$0xff]
        %v205 = vld [vmem:[%s168 + $0x98] sm:$0xff]
        %v206 = vld [vmem:[%s168 + $0xa0] sm:$0x3]
        %v207 = vld [vmem:[%s168 + $0xa8] sm:$0xff]
        %v208 = vld [vmem:[%s168 + $0xb0] sm:$0xff]
        %v209 = vld [vmem:[%s168 + $0xb8] sm:$0x3]
        %v210 = vld [vmem:[%s168 + $0xc0] sm:$0xff]
        %v211 = vld [vmem:[%s168 + $0xc8] sm:$0xff]
        %v212 = vld [vmem:[%s168 + $0xd0] sm:$0x3]
        %v213 = vld [vmem:[%s168 + $0xd8] sm:$0xff]
        %v214 = vld [vmem:[%s168 + $0xe0] sm:$0xff]
        %v215 = vld [vmem:[%s168 + $0xe8] sm:$0x3]
        %v216 = vpack.c.bf16 %v186, %v186
        %v217 = vpack.c.bf16 %v187, %v187
        %v218 = vpack.c.bf16 %v188, %v188
        %v219 = vpack.c.bf16 %v189, %v189
        %v220 = vpack.c.bf16 %v190, %v190
        %v221 = vpack.c.bf16 %v191, %v191
        %v222 = vpack.c.bf16 %v192, %v192
        %v223 = vpack.c.bf16 %v193, %v193
        %v224 = vpack.c.bf16 %v194, %v194
        %v225 = vpack.c.bf16 %v195, %v195
        %v226 = vpack.c.bf16 %v196, %v196
        %v227 = vpack.c.bf16 %v197, %v197
        %v228 = vpack.c.bf16 %v198, %v198
        %v229 = vpack.c.bf16 %v199, %v199
        %v230 = vpack.c.bf16 %v200, %v200
        %v231 = vpack.c.bf16 %v201, %v201
        %v232 = vpack.c.bf16 %v202, %v202
        %v233 = vpack.c.bf16 %v203, %v203
        %v234 = vpack.c.bf16 %v204, %v204
        %v235 = vpack.c.bf16 %v205, %v205
        %v236 = vpack.c.bf16 %v206, %v206
        %v237 = vpack.c.bf16 %v207, %v207
        %v238 = vpack.c.bf16 %v208, %v208
        %v239 = vpack.c.bf16 %v209, %v209
        %v240 = vpack.c.bf16 %v210, %v210
        %v241 = vpack.c.bf16 %v211, %v211
        %v242 = vpack.c.bf16 %v212, %v212
        %v243 = vpack.c.bf16 %v213, %v213
        %v244 = vpack.c.bf16 %v214, %v214
        %v245 = vpack.c.bf16 %v215, %v215
        %v246 = vld [vmem:[#allocation2] sm:$0xff]
        %v247 = vld [vmem:[#allocation2 + $0x8] sm:$0xff]
        %v248 = vld [vmem:[#allocation2 + $0x10] sm:$0xff]
        %v249 = vld [vmem:[#allocation2 + $0x18] sm:$0xff]
        %v250 = vld [vmem:[#allocation2 + $0x20] sm:$0xff]
        %v251 = vld [vmem:[#allocation2 + $0x28] sm:$0xff]
        %v252 = vld [vmem:[#allocation2 + $0x30] sm:$0xff]
        %v253 = vld [vmem:[#allocation2 + $0x38] sm:$0xff]
        %v254 = vld [vmem:[#allocation2 + $0x40] sm:$0xff]
        %v255 = vld [vmem:[#allocation2 + $0x48] sm:$0xff]
        %v256 = vld [vmem:[#allocation2 + $0x50] sm:$0xff]
        %v257 = vld [vmem:[#allocation2 + $0x58] sm:$0xff]
        %v258 = vld [vmem:[#allocation2 + $0x60] sm:$0xff]
        %v259 = vld [vmem:[#allocation2 + $0x68] sm:$0xff]
        %v260 = vld [vmem:[#allocation2 + $0x70] sm:$0xff]
        %v261 = vld [vmem:[#allocation2 + $0x78] sm:$0xff]
        %v262 = vld [vmem:[%s1] sm:$0x3]
        %v279 = vunpack.c.l.b16 %v216
        %v280 = vunpack.c.l.b16 %v217
        %v281 = vunpack.c.l.b16 %v219
        %v282 = vunpack.c.l.b16 %v220
        %v283 = vunpack.c.l.b16 %v222
        %v284 = vunpack.c.l.b16 %v223
        %v285 = vunpack.c.l.b16 %v225
        %v286 = vunpack.c.l.b16 %v226
        %v287 = vunpack.c.l.b16 %v228
        %v288 = vunpack.c.l.b16 %v229
        %v289 = vunpack.c.l.b16 %v231
        %v290 = vunpack.c.l.b16 %v232
        %v291 = vunpack.c.l.b16 %v234
        %v292 = vunpack.c.l.b16 %v235
        %v293 = vunpack.c.l.b16 %v237
        %v294 = vunpack.c.l.b16 %v238
        %v295 = vpack.c.b16 %v280, %v279
        %v296 = vpack.c.b16 %v282, %v281
        %v297 = vpack.c.b16 %v284, %v283
        %v298 = vpack.c.b16 %v286, %v285
        %v299 = vpack.c.b16 %v288, %v287
        %v300 = vpack.c.b16 %v290, %v289
        %v301 = vpack.c.b16 %v292, %v291
        %v302 = vpack.c.b16 %v294, %v293
        %vm303 = vcmask 31744
        %v305 = vsel %vm303, %v295, 0
        %v308 = vsel %vm303, %v296, 0
        %v311 = vsel %vm303, %v297, 0
        %v314 = vsel %vm303, %v298, 0
        %v317 = vsel %vm303, %v299, 0
        %v320 = vsel %vm303, %v300, 0
        %v323 = vsel %vm303, %v301, 0
        %v326 = vsel %vm303, %v302, 0
        %vm328 = vcmask 1041408
        %v330 = vsel %vm328, %v262, 0
        %332 = vmatpush.bf16.msra.mxu0 0
        %333 = vmatpush.bf16.msra.mxu0 0
        %334 = vmatpush.bf16.msra.mxu0 0
        %335 = vmatpush.bf16.msra.mxu0 0
        %336 = vmatpush.bf16.msra.mxu0 0
        %337 = vmatpush.bf16.msra.mxu0 0
        %338 = vmatpush.bf16.msra.mxu0 0
        %339 = vmatpush.bf16.msra.mxu0 %v330
        %340 = vmatmul.bf16.gmra.mxu0 %v305
        %v341 = vpop.f32.mrf.mxu0
        %v342 = vadd.f32 0.0, %v341
        %v343 = vpop.f32.mrf.mxu0
        %v344 = vadd.f32 0.0, %v343
        %345 = vmatmul.bf16.gmra.mxu0 %v308
        %v346 = vpop.f32.mrf.mxu0
        %v347 = vadd.f32 0.0, %v346
        %v348 = vpop.f32.mrf.mxu0
        %v349 = vadd.f32 0.0, %v348
        %350 = vmatmul.bf16.gmra.mxu0 %v311
        %v351 = vpop.f32.mrf.mxu0
        %v352 = vadd.f32 0.0, %v351
        %v353 = vpop.f32.mrf.mxu0
        %v354 = vadd.f32 0.0, %v353
        %355 = vmatmul.bf16.gmra.mxu0 %v314
        %v356 = vpop.f32.mrf.mxu0
        %v357 = vadd.f32 0.0, %v356
        %v358 = vpop.f32.mrf.mxu0
        %v359 = vadd.f32 0.0, %v358
        %360 = vmatmul.bf16.gmra.mxu0 %v317
        %v361 = vpop.f32.mrf.mxu0
        %v362 = vadd.f32 0.0, %v361
        %v363 = vpop.f32.mrf.mxu0
        %v364 = vadd.f32 0.0, %v363
        %365 = vmatmul.bf16.gmra.mxu0 %v320
        %v366 = vpop.f32.mrf.mxu0
        %v367 = vadd.f32 0.0, %v366
        %v368 = vpop.f32.mrf.mxu0
        %v369 = vadd.f32 0.0, %v368
        %370 = vmatmul.bf16.gmra.mxu0 %v323
        %v371 = vpop.f32.mrf.mxu0
        %v372 = vadd.f32 0.0, %v371
        %v373 = vpop.f32.mrf.mxu0
        %v374 = vadd.f32 0.0, %v373
        %375 = vmatmul.bf16.gmra.mxu0 %v326
        %v376 = vpop.f32.mrf.mxu0
        %v377 = vadd.f32 0.0, %v376
        %v378 = vpop.f32.mrf.mxu0
        %v379 = vadd.f32 0.0, %v378
        %380 = vdwg.mxu0
        %v381 = vadd.f32 %v246, %v342
        %v382 = vadd.f32 %v247, %v344
        %v383 = vadd.f32 %v248, %v347
        %v384 = vadd.f32 %v249, %v349
        %v385 = vadd.f32 %v250, %v352
        %v386 = vadd.f32 %v251, %v354
        %v387 = vadd.f32 %v252, %v357
        %v388 = vadd.f32 %v253, %v359
        %v389 = vadd.f32 %v254, %v362
        %v390 = vadd.f32 %v255, %v364
        %v391 = vadd.f32 %v256, %v367
        %v392 = vadd.f32 %v257, %v369
        %v393 = vadd.f32 %v258, %v372
        %v394 = vadd.f32 %v259, %v374
        %v395 = vadd.f32 %v260, %v377
        %v396 = vadd.f32 %v261, %v379
        %397 = vst [vmem:[#allocation2] sm:$0xff] %v381
        %398 = vst [vmem:[#allocation2 + $0x8] sm:$0xff] %v382
        %399 = vst [vmem:[#allocation2 + $0x10] sm:$0xff] %v383
        %400 = vst [vmem:[#allocation2 + $0x18] sm:$0xff] %v384
        %401 = vst [vmem:[#allocation2 + $0x20] sm:$0xff] %v385
        %402 = vst [vmem:[#allocation2 + $0x28] sm:$0xff] %v386
        %403 = vst [vmem:[#allocation2 + $0x30] sm:$0xff] %v387
        %404 = vst [vmem:[#allocation2 + $0x38] sm:$0xff] %v388
        %405 = vst [vmem:[#allocation2 + $0x40] sm:$0xff] %v389
        %406 = vst [vmem:[#allocation2 + $0x48] sm:$0xff] %v390
        %407 = vst [vmem:[#allocation2 + $0x50] sm:$0xff] %v391
        %408 = vst [vmem:[#allocation2 + $0x58] sm:$0xff] %v392
        %409 = vst [vmem:[#allocation2 + $0x60] sm:$0xff] %v393
        %410 = vst [vmem:[#allocation2 + $0x68] sm:$0xff] %v394
        %411 = vst [vmem:[#allocation2 + $0x70] sm:$0xff] %v395
        %412 = vst [vmem:[#allocation2 + $0x78] sm:$0xff] %v396
        %vm413 = vsmask.f32 3328
        %vm414 = vsmask.f32 7440
        %vm415 = vmor %vm413, %vm414
        %v417 = vshrl.u32 %v216, 16
        %v419 = vrot.slane %v417, 4
        %v420 = vshll.u32 %v216, 16
        %v422 = vrot.slane %v420, 5
        %v423 = vor.u32 %v419, %v422
        %v424 = vrot.slane %v423, 4
        %v426 = vshll.u32 %v217, 16
        %v428 = vrot.slane %v426, 5
        %v429 = vsel %vm415, %v424, %v428
        %v430 = vshrl.u32 %v217, 16
        %v432 = vrot.slane %v430, 4
        %v433 = vor.u32 %v432, %v428
        %v434 = vrot.slane %v433, 4
        %v436 = vshll.u32 %v218, 16
        %v438 = vrot.slane %v436, 5
        %v439 = vsel %vm415, %v434, %v438
        %v441 = vshrl.u32 %v219, 16
        %v443 = vrot.slane %v441, 4
        %v444 = vshll.u32 %v219, 16
        %v446 = vrot.slane %v444, 5
        %v447 = vor.u32 %v443, %v446
        %v448 = vrot.slane %v447, 4
        %v450 = vshll.u32 %v220, 16
        %v452 = vrot.slane %v450, 5
        %v453 = vsel %vm415, %v448, %v452
        %v454 = vshrl.u32 %v220, 16
        %v456 = vrot.slane %v454, 4
        %v457 = vor.u32 %v456, %v452
        %v458 = vrot.slane %v457, 4
        %v460 = vshll.u32 %v221, 16
        %v462 = vrot.slane %v460, 5
        %v463 = vsel %vm415, %v458, %v462
        %v465 = vshrl.u32 %v222, 16
        %v467 = vrot.slane %v465, 4
        %v468 = vshll.u32 %v222, 16
        %v470 = vrot.slane %v468, 5
        %v471 = vor.u32 %v467, %v470
        %v472 = vrot.slane %v471, 4
        %v474 = vshll.u32 %v223, 16
        %v476 = vrot.slane %v474, 5
        %v477 = vsel %vm415, %v472, %v476
        %v478 = vshrl.u32 %v223, 16
        %v480 = vrot.slane %v478, 4
        %v481 = vor.u32 %v480, %v476
        %v482 = vrot.slane %v481, 4
        %v484 = vshll.u32 %v224, 16
        %v486 = vrot.slane %v484, 5
        %v487 = vsel %vm415, %v482, %v486
        %v489 = vshrl.u32 %v225, 16
        %v491 = vrot.slane %v489, 4
        %v492 = vshll.u32 %v225, 16
        %v494 = vrot.slane %v492, 5
        %v495 = vor.u32 %v491, %v494
        %v496 = vrot.slane %v495, 4
        %v498 = vshll.u32 %v226, 16
        %v500 = vrot.slane %v498, 5
        %v501 = vsel %vm415, %v496, %v500
        %v502 = vshrl.u32 %v226, 16
        %v504 = vrot.slane %v502, 4
        %v505 = vor.u32 %v504, %v500
        %v506 = vrot.slane %v505, 4
        %v508 = vshll.u32 %v227, 16
        %v510 = vrot.slane %v508, 5
        %v511 = vsel %vm415, %v506, %v510
        %v513 = vshrl.u32 %v228, 16
        %v515 = vrot.slane %v513, 4
        %v516 = vshll.u32 %v228, 16
        %v518 = vrot.slane %v516, 5
        %v519 = vor.u32 %v515, %v518
        %v520 = vrot.slane %v519, 4
        %v522 = vshll.u32 %v229, 16
        %v524 = vrot.slane %v522, 5
        %v525 = vsel %vm415, %v520, %v524
        %v526 = vshrl.u32 %v229, 16
        %v528 = vrot.slane %v526, 4
        %v529 = vor.u32 %v528, %v524
        %v530 = vrot.slane %v529, 4
        %v532 = vshll.u32 %v230, 16
        %v534 = vrot.slane %v532, 5
        %v535 = vsel %vm415, %v530, %v534
        %v537 = vshrl.u32 %v231, 16
        %v539 = vrot.slane %v537, 4
        %v540 = vshll.u32 %v231, 16
        %v542 = vrot.slane %v540, 5
        %v543 = vor.u32 %v539, %v542
        %v544 = vrot.slane %v543, 4
        %v546 = vshll.u32 %v232, 16
        %v548 = vrot.slane %v546, 5
        %v549 = vsel %vm415, %v544, %v548
        %v550 = vshrl.u32 %v232, 16
        %v552 = vrot.slane %v550, 4
        %v553 = vor.u32 %v552, %v548
        %v554 = vrot.slane %v553, 4
        %v556 = vshll.u32 %v233, 16
        %v558 = vrot.slane %v556, 5
        %v559 = vsel %vm415, %v554, %v558
        %v561 = vshrl.u32 %v234, 16
        %v563 = vrot.slane %v561, 4
        %v564 = vshll.u32 %v234, 16
        %v566 = vrot.slane %v564, 5
        %v567 = vor.u32 %v563, %v566
        %v568 = vrot.slane %v567, 4
        %v570 = vshll.u32 %v235, 16
        %v572 = vrot.slane %v570, 5
        %v573 = vsel %vm415, %v568, %v572
        %v574 = vshrl.u32 %v235, 16
        %v576 = vrot.slane %v574, 4
        %v577 = vor.u32 %v576, %v572
        %v578 = vrot.slane %v577, 4
        %v580 = vshll.u32 %v236, 16
        %v582 = vrot.slane %v580, 5
        %v583 = vsel %vm415, %v578, %v582
        %v585 = vshrl.u32 %v237, 16
        %v587 = vrot.slane %v585, 4
        %v588 = vshll.u32 %v237, 16
        %v590 = vrot.slane %v588, 5
        %v591 = vor.u32 %v587, %v590
        %v592 = vrot.slane %v591, 4
        %v594 = vshll.u32 %v238, 16
        %v596 = vrot.slane %v594, 5
        %v597 = vsel %vm415, %v592, %v596
        %v598 = vshrl.u32 %v238, 16
        %v600 = vrot.slane %v598, 4
        %v601 = vor.u32 %v600, %v596
        %v602 = vrot.slane %v601, 4
        %v604 = vshll.u32 %v239, 16
        %v606 = vrot.slane %v604, 5
        %v607 = vsel %vm415, %v602, %v606
        %v608 = vld [vmem:[#allocation2] sm:$0xff]
        %v609 = vld [vmem:[#allocation2 + $0x8] sm:$0xff]
        %v610 = vld [vmem:[#allocation2 + $0x10] sm:$0xff]
        %v611 = vld [vmem:[#allocation2 + $0x18] sm:$0xff]
        %v612 = vld [vmem:[#allocation2 + $0x20] sm:$0xff]
        %v613 = vld [vmem:[#allocation2 + $0x28] sm:$0xff]
        %v614 = vld [vmem:[#allocation2 + $0x30] sm:$0xff]
        %v615 = vld [vmem:[#allocation2 + $0x38] sm:$0xff]
        %v616 = vld [vmem:[#allocation2 + $0x40] sm:$0xff]
        %v617 = vld [vmem:[#allocation2 + $0x48] sm:$0xff]
        %v618 = vld [vmem:[#allocation2 + $0x50] sm:$0xff]
        %v619 = vld [vmem:[#allocation2 + $0x58] sm:$0xff]
        %v620 = vld [vmem:[#allocation2 + $0x60] sm:$0xff]
        %v621 = vld [vmem:[#allocation2 + $0x68] sm:$0xff]
        %v622 = vld [vmem:[#allocation2 + $0x70] sm:$0xff]
        %v623 = vld [vmem:[#allocation2 + $0x78] sm:$0xff]
        %s624 = scalar_lea.vmem %s1, 2
        %v625 = vld [vmem:[%s624] sm:$0x3]
        %v626 = vunpack.c.l.b16 %v429
        %v627 = vunpack.c.l.b16 %v439
        %v628 = vunpack.c.l.b16 %v453
        %v629 = vunpack.c.l.b16 %v463
        %v630 = vunpack.c.l.b16 %v477
        %v631 = vunpack.c.l.b16 %v487
        %v632 = vunpack.c.l.b16 %v501
        %v633 = vunpack.c.l.b16 %v511
        %v634 = vunpack.c.l.b16 %v525
        %v635 = vunpack.c.l.b16 %v535
        %v636 = vunpack.c.l.b16 %v549
        %v637 = vunpack.c.l.b16 %v559
        %v638 = vunpack.c.l.b16 %v573
        %v639 = vunpack.c.l.b16 %v583
        %v640 = vunpack.c.l.b16 %v597
        %v641 = vunpack.c.l.b16 %v607
        %v642 = vpack.c.b16 %v627, %v626
        %v643 = vpack.c.b16 %v629, %v628
        %v644 = vpack.c.b16 %v631, %v630
        %v645 = vpack.c.b16 %v633, %v632
        %v646 = vpack.c.b16 %v635, %v634
        %v647 = vpack.c.b16 %v637, %v636
        %v648 = vpack.c.b16 %v639, %v638
        %v649 = vpack.c.b16 %v641, %v640
        %v651 = vsel %vm303, %v642, 0
        %v654 = vsel %vm303, %v643, 0
        %v657 = vsel %vm303, %v644, 0
        %v660 = vsel %vm303, %v645, 0
        %v663 = vsel %vm303, %v646, 0
        %v666 = vsel %vm303, %v647, 0
        %v669 = vsel %vm303, %v648, 0
        %v672 = vsel %vm303, %v649, 0
        %v675 = vsel %vm328, %v625, 0
        %677 = vmatpush.bf16.msra.mxu0 0
        %678 = vmatpush.bf16.msra.mxu0 0
        %679 = vmatpush.bf16.msra.mxu0 0
        %680 = vmatpush.bf16.msra.mxu0 0
        %681 = vmatpush.bf16.msra.mxu0 0
        %682 = vmatpush.bf16.msra.mxu0 0
        %683 = vmatpush.bf16.msra.mxu0 0
        %684 = vmatpush.bf16.msra.mxu0 %v675
        %685 = vmatmul.bf16.gmra.mxu0 %v651
        %v686 = vpop.f32.mrf.mxu0
        %v687 = vadd.f32 0.0, %v686
        %v688 = vpop.f32.mrf.mxu0
        %v689 = vadd.f32 0.0, %v688
        %690 = vmatmul.bf16.gmra.mxu0 %v654
        %v691 = vpop.f32.mrf.mxu0
        %v692 = vadd.f32 0.0, %v691
        %v693 = vpop.f32.mrf.mxu0
        %v694 = vadd.f32 0.0, %v693
        %695 = vmatmul.bf16.gmra.mxu0 %v657
        %v696 = vpop.f32.mrf.mxu0
        %v697 = vadd.f32 0.0, %v696
        %v698 = vpop.f32.mrf.mxu0
        %v699 = vadd.f32 0.0, %v698
        %700 = vmatmul.bf16.gmra.mxu0 %v660
        %v701 = vpop.f32.mrf.mxu0
        %v702 = vadd.f32 0.0, %v701
        %v703 = vpop.f32.mrf.mxu0
        %v704 = vadd.f32 0.0, %v703
        %705 = vmatmul.bf16.gmra.mxu0 %v663
        %v706 = vpop.f32.mrf.mxu0
        %v707 = vadd.f32 0.0, %v706
        %v708 = vpop.f32.mrf.mxu0
        %v709 = vadd.f32 0.0, %v708
        %710 = vmatmul.bf16.gmra.mxu0 %v666
        %v711 = vpop.f32.mrf.mxu0
        %v712 = vadd.f32 0.0, %v711
        %v713 = vpop.f32.mrf.mxu0
        %v714 = vadd.f32 0.0, %v713
        %715 = vmatmul.bf16.gmra.mxu0 %v669
        %v716 = vpop.f32.mrf.mxu0
        %v717 = vadd.f32 0.0, %v716
        %v718 = vpop.f32.mrf.mxu0
        %v719 = vadd.f32 0.0, %v718
        %720 = vmatmul.bf16.gmra.mxu0 %v672
        %v721 = vpop.f32.mrf.mxu0
        %v722 = vadd.f32 0.0, %v721
        %v723 = vpop.f32.mrf.mxu0
        %v724 = vadd.f32 0.0, %v723
        %725 = vdwg.mxu0
        %v726 = vadd.f32 %v608, %v687
        %v727 = vadd.f32 %v609, %v689
        %v728 = vadd.f32 %v610, %v692
        %v729 = vadd.f32 %v611, %v694
        %v730 = vadd.f32 %v612, %v697
        %v731 = vadd.f32 %v613, %v699
        %v732 = vadd.f32 %v614, %v702
        %v733 = vadd.f32 %v615, %v704
        %v734 = vadd.f32 %v616, %v707
        %v735 = vadd.f32 %v617, %v709
        %v736 = vadd.f32 %v618, %v712
        %v737 = vadd.f32 %v619, %v714
        %v738 = vadd.f32 %v620, %v717
        %v739 = vadd.f32 %v621, %v719
        %v740 = vadd.f32 %v622, %v722
        %v741 = vadd.f32 %v623, %v724
        %742 = vst [vmem:[#allocation2] sm:$0xff] %v726
        %743 = vst [vmem:[#allocation2 + $0x8] sm:$0xff] %v727
        %744 = vst [vmem:[#allocation2 + $0x10] sm:$0xff] %v728
        %745 = vst [vmem:[#allocation2 + $0x18] sm:$0xff] %v729
        %746 = vst [vmem:[#allocation2 + $0x20] sm:$0xff] %v730
        %747 = vst [vmem:[#allocation2 + $0x28] sm:$0xff] %v731
        %748 = vst [vmem:[#allocation2 + $0x30] sm:$0xff] %v732
        %749 = vst [vmem:[#allocation2 + $0x38] sm:$0xff] %v733
        %750 = vst [vmem:[#allocation2 + $0x40] sm:$0xff] %v734
        %751 = vst [vmem:[#allocation2 + $0x48] sm:$0xff] %v735
        %752 = vst [vmem:[#allocation2 + $0x50] sm:$0xff] %v736
        %753 = vst [vmem:[#allocation2 + $0x58] sm:$0xff] %v737
        %754 = vst [vmem:[#allocation2 + $0x60] sm:$0xff] %v738
        %755 = vst [vmem:[#allocation2 + $0x68] sm:$0xff] %v739
        %756 = vst [vmem:[#allocation2 + $0x70] sm:$0xff] %v740
        %757 = vst [vmem:[#allocation2 + $0x78] sm:$0xff] %v741
        %vm766 = vcmask 1042432
        %vm767 = vcmask 1046532
        %vm768 = vmor %vm766, %vm767
        %v769 = vrot.slane %v216, 5
        %v770 = vrot.slane %v769, 4
        %v771 = vrot.slane %v217, 5
        %v772 = vsel %vm768, %v770, %v771
        %v773 = vrot.slane %v771, 4
        %v774 = vrot.slane %v218, 5
        %v775 = vsel %vm768, %v773, %v774
        %v776 = vrot.slane %v219, 5
        %v777 = vrot.slane %v776, 4
        %v778 = vrot.slane %v220, 5
        %v779 = vsel %vm768, %v777, %v778
        %v780 = vrot.slane %v778, 4
        %v781 = vrot.slane %v221, 5
        %v782 = vsel %vm768, %v780, %v781
        %v783 = vrot.slane %v222, 5
        %v784 = vrot.slane %v783, 4
        %v785 = vrot.slane %v223, 5
        %v786 = vsel %vm768, %v784, %v785
        %v787 = vrot.slane %v785, 4
        %v788 = vrot.slane %v224, 5
        %v789 = vsel %vm768, %v787, %v788
        %v790 = vrot.slane %v225, 5
        %v791 = vrot.slane %v790, 4
        %v792 = vrot.slane %v226, 5
        %v793 = vsel %vm768, %v791, %v792
        %v794 = vrot.slane %v792, 4
        %v795 = vrot.slane %v227, 5
        %v796 = vsel %vm768, %v794, %v795
        %v797 = vrot.slane %v228, 5
        %v798 = vrot.slane %v797, 4
        %v799 = vrot.slane %v229, 5
        %v800 = vsel %vm768, %v798, %v799
        %v801 = vrot.slane %v799, 4
        %v802 = vrot.slane %v230, 5
        %v803 = vsel %vm768, %v801, %v802
        %v804 = vrot.slane %v231, 5
        %v805 = vrot.slane %v804, 4
        %v806 = vrot.slane %v232, 5
        %v807 = vsel %vm768, %v805, %v806
        %v808 = vrot.slane %v806, 4
        %v809 = vrot.slane %v233, 5
        %v810 = vsel %vm768, %v808, %v809
        %v811 = vrot.slane %v234, 5
        %v812 = vrot.slane %v811, 4
        %v813 = vrot.slane %v235, 5
        %v814 = vsel %vm768, %v812, %v813
        %v815 = vrot.slane %v813, 4
        %v816 = vrot.slane %v236, 5
        %v817 = vsel %vm768, %v815, %v816
        %v818 = vrot.slane %v237, 5
        %v819 = vrot.slane %v818, 4
        %v820 = vrot.slane %v238, 5
        %v821 = vsel %vm768, %v819, %v820
        %v822 = vrot.slane %v820, 4
        %v823 = vrot.slane %v239, 5
        %v824 = vsel %vm768, %v822, %v823
        %v825 = vld [vmem:[#allocation2] sm:$0xff]
        %v826 = vld [vmem:[#allocation2 + $0x8] sm:$0xff]
        %v827 = vld [vmem:[#allocation2 + $0x10] sm:$0xff]
        %v828 = vld [vmem:[#allocation2 + $0x18] sm:$0xff]
        %v829 = vld [vmem:[#allocation2 + $0x20] sm:$0xff]
        %v830 = vld [vmem:[#allocation2 + $0x28] sm:$0xff]
        %v831 = vld [vmem:[#allocation2 + $0x30] sm:$0xff]
        %v832 = vld [vmem:[#allocation2 + $0x38] sm:$0xff]
        %v833 = vld [vmem:[#allocation2 + $0x40] sm:$0xff]
        %v834 = vld [vmem:[#allocation2 + $0x48] sm:$0xff]
        %v835 = vld [vmem:[#allocation2 + $0x50] sm:$0xff]
        %v836 = vld [vmem:[#allocation2 + $0x58] sm:$0xff]
        %v837 = vld [vmem:[#allocation2 + $0x60] sm:$0xff]
        %v838 = vld [vmem:[#allocation2 + $0x68] sm:$0xff]
        %v839 = vld [vmem:[#allocation2 + $0x70] sm:$0xff]
        %v840 = vld [vmem:[#allocation2 + $0x78] sm:$0xff]
        %s841 = scalar_lea.vmem %s1, 4
        %v842 = vld [vmem:[%s841] sm:$0x3]
        %v843 = vunpack.c.l.b16 %v772
        %v844 = vunpack.c.l.b16 %v775
        %v845 = vunpack.c.l.b16 %v779
        %v846 = vunpack.c.l.b16 %v782
        %v847 = vunpack.c.l.b16 %v786
        %v848 = vunpack.c.l.b16 %v789
        %v849 = vunpack.c.l.b16 %v793
        %v850 = vunpack.c.l.b16 %v796
        %v851 = vunpack.c.l.b16 %v800
        %v852 = vunpack.c.l.b16 %v803
        %v853 = vunpack.c.l.b16 %v807
        %v854 = vunpack.c.l.b16 %v810
        %v855 = vunpack.c.l.b16 %v814
        %v856 = vunpack.c.l.b16 %v817
        %v857 = vunpack.c.l.b16 %v821
        %v858 = vunpack.c.l.b16 %v824
        %v859 = vpack.c.b16 %v844, %v843
        %v860 = vpack.c.b16 %v846, %v845
        %v861 = vpack.c.b16 %v848, %v847
        %v862 = vpack.c.b16 %v850, %v849
        %v863 = vpack.c.b16 %v852, %v851
        %v864 = vpack.c.b16 %v854, %v853
        %v865 = vpack.c.b16 %v856, %v855
        %v866 = vpack.c.b16 %v858, %v857
        %v868 = vsel %vm303, %v859, 0
        %v871 = vsel %vm303, %v860, 0
        %v874 = vsel %vm303, %v861, 0
        %v877 = vsel %vm303, %v862, 0
        %v880 = vsel %vm303, %v863, 0
        %v883 = vsel %vm303, %v864, 0
        %v886 = vsel %vm303, %v865, 0
        %v889 = vsel %vm303, %v866, 0
        %v892 = vsel %vm328, %v842, 0
        %894 = vmatpush.bf16.msra.mxu0 0
        %895 = vmatpush.bf16.msra.mxu0 0
        %896 = vmatpush.bf16.msra.mxu0 0
        %897 = vmatpush.bf16.msra.mxu0 0
        %898 = vmatpush.bf16.msra.mxu0 0
        %899 = vmatpush.bf16.msra.mxu0 0
        %900 = vmatpush.bf16.msra.mxu0 0
        %901 = vmatpush.bf16.msra.mxu0 %v892
        %902 = vmatmul.bf16.gmra.mxu0 %v868
        %v903 = vpop.f32.mrf.mxu0
        %v904 = vadd.f32 0.0, %v903
        %v905 = vpop.f32.mrf.mxu0
        %v906 = vadd.f32 0.0, %v905
        %907 = vmatmul.bf16.gmra.mxu0 %v871
        %v908 = vpop.f32.mrf.mxu0
        %v909 = vadd.f32 0.0, %v908
        %v910 = vpop.f32.mrf.mxu0
        %v911 = vadd.f32 0.0, %v910
        %912 = vmatmul.bf16.gmra.mxu0 %v874
        %v913 = vpop.f32.mrf.mxu0
        %v914 = vadd.f32 0.0, %v913
        %v915 = vpop.f32.mrf.mxu0
        %v916 = vadd.f32 0.0, %v915
        %917 = vmatmul.bf16.gmra.mxu0 %v877
        %v918 = vpop.f32.mrf.mxu0
        %v919 = vadd.f32 0.0, %v918
        %v920 = vpop.f32.mrf.mxu0
        %v921 = vadd.f32 0.0, %v920
        %922 = vmatmul.bf16.gmra.mxu0 %v880
        %v923 = vpop.f32.mrf.mxu0
        %v924 = vadd.f32 0.0, %v923
        %v925 = vpop.f32.mrf.mxu0
        %v926 = vadd.f32 0.0, %v925
        %927 = vmatmul.bf16.gmra.mxu0 %v883
        %v928 = vpop.f32.mrf.mxu0
        %v929 = vadd.f32 0.0, %v928
        %v930 = vpop.f32.mrf.mxu0
        %v931 = vadd.f32 0.0, %v930
        %932 = vmatmul.bf16.gmra.mxu0 %v886
        %v933 = vpop.f32.mrf.mxu0
        %v934 = vadd.f32 0.0, %v933
        %v935 = vpop.f32.mrf.mxu0
        %v936 = vadd.f32 0.0, %v935
        %937 = vmatmul.bf16.gmra.mxu0 %v889
        %v938 = vpop.f32.mrf.mxu0
        %v939 = vadd.f32 0.0, %v938
        %v940 = vpop.f32.mrf.mxu0
        %v941 = vadd.f32 0.0, %v940
        %942 = vdwg.mxu0
        %v943 = vadd.f32 %v825, %v904
        %v944 = vadd.f32 %v826, %v906
        %v945 = vadd.f32 %v827, %v909
        %v946 = vadd.f32 %v828, %v911
        %v947 = vadd.f32 %v829, %v914
        %v948 = vadd.f32 %v830, %v916
        %v949 = vadd.f32 %v831, %v919
        %v950 = vadd.f32 %v832, %v921
        %v951 = vadd.f32 %v833, %v924
        %v952 = vadd.f32 %v834, %v926
        %v953 = vadd.f32 %v835, %v929
        %v954 = vadd.f32 %v836, %v931
        %v955 = vadd.f32 %v837, %v934
        %v956 = vadd.f32 %v838, %v936
        %v957 = vadd.f32 %v839, %v939
        %v958 = vadd.f32 %v840, %v941
        %959 = vst [vmem:[#allocation2] sm:$0xff] %v943
        %960 = vst [vmem:[#allocation2 + $0x8] sm:$0xff] %v944
        %961 = vst [vmem:[#allocation2 + $0x10] sm:$0xff] %v945
        %962 = vst [vmem:[#allocation2 + $0x18] sm:$0xff] %v946
        %963 = vst [vmem:[#allocation2 + $0x20] sm:$0xff] %v947
        %964 = vst [vmem:[#allocation2 + $0x28] sm:$0xff] %v948
        %965 = vst [vmem:[#allocation2 + $0x30] sm:$0xff] %v949
        %966 = vst [vmem:[#allocation2 + $0x38] sm:$0xff] %v950
        %967 = vst [vmem:[#allocation2 + $0x40] sm:$0xff] %v951
        %968 = vst [vmem:[#allocation2 + $0x48] sm:$0xff] %v952
        %969 = vst [vmem:[#allocation2 + $0x50] sm:$0xff] %v953
        %970 = vst [vmem:[#allocation2 + $0x58] sm:$0xff] %v954
        %971 = vst [vmem:[#allocation2 + $0x60] sm:$0xff] %v955
        %972 = vst [vmem:[#allocation2 + $0x68] sm:$0xff] %v956
        %973 = vst [vmem:[#allocation2 + $0x70] sm:$0xff] %v957
        %974 = vst [vmem:[#allocation2 + $0x78] sm:$0xff] %v958
        %v975 = vld [vmem:[#allocation2] sm:$0xff]
        %v976 = vld [vmem:[#allocation2 + $0x8] sm:$0xff]
        %v977 = vld [vmem:[#allocation2 + $0x10] sm:$0xff]
        %v978 = vld [vmem:[#allocation2 + $0x18] sm:$0xff]
        %v979 = vld [vmem:[#allocation2 + $0x20] sm:$0xff]
        %v980 = vld [vmem:[#allocation2 + $0x28] sm:$0xff]
        %v981 = vld [vmem:[#allocation2 + $0x30] sm:$0xff]
        %v982 = vld [vmem:[#allocation2 + $0x38] sm:$0xff]
        %v983 = vld [vmem:[#allocation2 + $0x40] sm:$0xff]
        %v984 = vld [vmem:[#allocation2 + $0x48] sm:$0xff]
        %v985 = vld [vmem:[#allocation2 + $0x50] sm:$0xff]
        %v986 = vld [vmem:[#allocation2 + $0x58] sm:$0xff]
        %v987 = vld [vmem:[#allocation2 + $0x60] sm:$0xff]
        %v988 = vld [vmem:[#allocation2 + $0x68] sm:$0xff]
        %v989 = vld [vmem:[#allocation2 + $0x70] sm:$0xff]
        %v990 = vld [vmem:[#allocation2 + $0x78] sm:$0xff]
        %s991 = scalar_lea.vmem %s1, 6
        %v992 = vld [vmem:[%s991] sm:$0x3]
        %v995 = vunpack.c.l.b16 %v240
        %v996 = vunpack.c.l.b16 %v241
        %v997 = vpack.c.b16 %v996, %v995
        %v999 = vsel %vm303, %v997, 0
        %v1002 = vsel %vm328, %v992, 0
        %1004 = vmatpush.bf16.msra.mxu0 0
        %1005 = vmatpush.bf16.msra.mxu0 0
        %1006 = vmatpush.bf16.msra.mxu0 0
        %1007 = vmatpush.bf16.msra.mxu0 0
        %1008 = vmatpush.bf16.msra.mxu0 0
        %1009 = vmatpush.bf16.msra.mxu0 0
        %1010 = vmatpush.bf16.msra.mxu0 0
        %1011 = vmatpush.bf16.msra.mxu0 %v1002
        %1012 = vmatmul.bf16.gmra.mxu0 %v308
        %v1013 = vpop.f32.mrf.mxu0
        %v1014 = vadd.f32 0.0, %v1013
        %v1015 = vpop.f32.mrf.mxu0
        %v1016 = vadd.f32 0.0, %v1015
        %1017 = vmatmul.bf16.gmra.mxu0 %v311
        %v1018 = vpop.f32.mrf.mxu0
        %v1019 = vadd.f32 0.0, %v1018
        %v1020 = vpop.f32.mrf.mxu0
        %v1021 = vadd.f32 0.0, %v1020
        %1022 = vmatmul.bf16.gmra.mxu0 %v314
        %v1023 = vpop.f32.mrf.mxu0
        %v1024 = vadd.f32 0.0, %v1023
        %v1025 = vpop.f32.mrf.mxu0
        %v1026 = vadd.f32 0.0, %v1025
        %1027 = vmatmul.bf16.gmra.mxu0 %v317
        %v1028 = vpop.f32.mrf.mxu0
        %v1029 = vadd.f32 0.0, %v1028
        %v1030 = vpop.f32.mrf.mxu0
        %v1031 = vadd.f32 0.0, %v1030
        %1032 = vmatmul.bf16.gmra.mxu0 %v320
        %v1033 = vpop.f32.mrf.mxu0
        %v1034 = vadd.f32 0.0, %v1033
        %v1035 = vpop.f32.mrf.mxu0
        %v1036 = vadd.f32 0.0, %v1035
        %1037 = vmatmul.bf16.gmra.mxu0 %v323
        %v1038 = vpop.f32.mrf.mxu0
        %v1039 = vadd.f32 0.0, %v1038
        %v1040 = vpop.f32.mrf.mxu0
        %v1041 = vadd.f32 0.0, %v1040
        %1042 = vmatmul.bf16.gmra.mxu0 %v326
        %v1043 = vpop.f32.mrf.mxu0
        %v1044 = vadd.f32 0.0, %v1043
        %v1045 = vpop.f32.mrf.mxu0
        %v1046 = vadd.f32 0.0, %v1045
        %1047 = vmatmul.bf16.gmra.mxu0 %v999
        %v1048 = vpop.f32.mrf.mxu0
        %v1049 = vadd.f32 0.0, %v1048
        %v1050 = vpop.f32.mrf.mxu0
        %v1051 = vadd.f32 0.0, %v1050
        %1052 = vdwg.mxu0
        %v1053 = vadd.f32 %v975, %v1014
        %v1054 = vadd.f32 %v976, %v1016
        %v1055 = vadd.f32 %v977, %v1019
        %v1056 = vadd.f32 %v978, %v1021
        %v1057 = vadd.f32 %v979, %v1024
        %v1058 = vadd.f32 %v980, %v1026
        %v1059 = vadd.f32 %v981, %v1029
        %v1060 = vadd.f32 %v982, %v1031
        %v1061 = vadd.f32 %v983, %v1034
        %v1062 = vadd.f32 %v984, %v1036
        %v1063 = vadd.f32 %v985, %v1039
        %v1064 = vadd.f32 %v986, %v1041
        %v1065 = vadd.f32 %v987, %v1044
        %v1066 = vadd.f32 %v988, %v1046
        %v1067 = vadd.f32 %v989, %v1049
        %v1068 = vadd.f32 %v990, %v1051
        %1069 = vst [vmem:[#allocation2] sm:$0xff] %v1053
        %1070 = vst [vmem:[#allocation2 + $0x8] sm:$0xff] %v1054
        %1071 = vst [vmem:[#allocation2 + $0x10] sm:$0xff] %v1055
        %1072 = vst [vmem:[#allocation2 + $0x18] sm:$0xff] %v1056
        %1073 = vst [vmem:[#allocation2 + $0x20] sm:$0xff] %v1057
        %1074 = vst [vmem:[#allocation2 + $0x28] sm:$0xff] %v1058
        %1075 = vst [vmem:[#allocation2 + $0x30] sm:$0xff] %v1059
        %1076 = vst [vmem:[#allocation2 + $0x38] sm:$0xff] %v1060
        %1077 = vst [vmem:[#allocation2 + $0x40] sm:$0xff] %v1061
        %1078 = vst [vmem:[#allocation2 + $0x48] sm:$0xff] %v1062
        %1079 = vst [vmem:[#allocation2 + $0x50] sm:$0xff] %v1063
        %1080 = vst [vmem:[#allocation2 + $0x58] sm:$0xff] %v1064
        %1081 = vst [vmem:[#allocation2 + $0x60] sm:$0xff] %v1065
        %1082 = vst [vmem:[#allocation2 + $0x68] sm:$0xff] %v1066
        %1083 = vst [vmem:[#allocation2 + $0x70] sm:$0xff] %v1067
        %1084 = vst [vmem:[#allocation2 + $0x78] sm:$0xff] %v1068
        %v1086 = vshrl.u32 %v240, 16
        %v1088 = vrot.slane %v1086, 4
        %v1089 = vshll.u32 %v240, 16
        %v1091 = vrot.slane %v1089, 5
        %v1092 = vor.u32 %v1088, %v1091
        %v1093 = vrot.slane %v1092, 4
        %v1095 = vshll.u32 %v241, 16
        %v1097 = vrot.slane %v1095, 5
        %v1098 = vsel %vm415, %v1093, %v1097
        %v1099 = vshrl.u32 %v241, 16
        %v1101 = vrot.slane %v1099, 4
        %v1102 = vor.u32 %v1101, %v1097
        %v1103 = vrot.slane %v1102, 4
        %v1105 = vshll.u32 %v242, 16
        %v1107 = vrot.slane %v1105, 5
        %v1108 = vsel %vm415, %v1103, %v1107
        %v1109 = vld [vmem:[#allocation2] sm:$0xff]
        %v1110 = vld [vmem:[#allocation2 + $0x8] sm:$0xff]
        %v1111 = vld [vmem:[#allocation2 + $0x10] sm:$0xff]
        %v1112 = vld [vmem:[#allocation2 + $0x18] sm:$0xff]
        %v1113 = vld [vmem:[#allocation2 + $0x20] sm:$0xff]
        %v1114 = vld [vmem:[#allocation2 + $0x28] sm:$0xff]
        %v1115 = vld [vmem:[#allocation2 + $0x30] sm:$0xff]
        %v1116 = vld [vmem:[#allocation2 + $0x38] sm:$0xff]
        %v1117 = vld [vmem:[#allocation2 + $0x40] sm:$0xff]
        %v1118 = vld [vmem:[#allocation2 + $0x48] sm:$0xff]
        %v1119 = vld [vmem:[#allocation2 + $0x50] sm:$0xff]
        %v1120 = vld [vmem:[#allocation2 + $0x58] sm:$0xff]
        %v1121 = vld [vmem:[#allocation2 + $0x60] sm:$0xff]
        %v1122 = vld [vmem:[#allocation2 + $0x68] sm:$0xff]
        %v1123 = vld [vmem:[#allocation2 + $0x70] sm:$0xff]
        %v1124 = vld [vmem:[#allocation2 + $0x78] sm:$0xff]
        %s1125 = scalar_lea.vmem %s1, 8
        %v1126 = vld [vmem:[%s1125] sm:$0x3]
        %v1127 = vunpack.c.l.b16 %v1098
        %v1128 = vunpack.c.l.b16 %v1108
        %v1129 = vpack.c.b16 %v1128, %v1127
        %v1131 = vsel %vm303, %v1129, 0
        %v1134 = vsel %vm328, %v1126, 0
        %1136 = vmatpush.bf16.msra.mxu0 0
        %1137 = vmatpush.bf16.msra.mxu0 0
        %1138 = vmatpush.bf16.msra.mxu0 0
        %1139 = vmatpush.bf16.msra.mxu0 0
        %1140 = vmatpush.bf16.msra.mxu0 0
        %1141 = vmatpush.bf16.msra.mxu0 0
        %1142 = vmatpush.bf16.msra.mxu0 0
        %1143 = vmatpush.bf16.msra.mxu0 %v1134
        %1144 = vmatmul.bf16.gmra.mxu0 %v654
        %v1145 = vpop.f32.mrf.mxu0
        %v1146 = vadd.f32 0.0, %v1145
        %v1147 = vpop.f32.mrf.mxu0
        %v1148 = vadd.f32 0.0, %v1147
        %1149 = vmatmul.bf16.gmra.mxu0 %v657
        %v1150 = vpop.f32.mrf.mxu0
        %v1151 = vadd.f32 0.0, %v1150
        %v1152 = vpop.f32.mrf.mxu0
        %v1153 = vadd.f32 0.0, %v1152
        %1154 = vmatmul.bf16.gmra.mxu0 %v660
        %v1155 = vpop.f32.mrf.mxu0
        %v1156 = vadd.f32 0.0, %v1155
        %v1157 = vpop.f32.mrf.mxu0
        %v1158 = vadd.f32 0.0, %v1157
        %1159 = vmatmul.bf16.gmra.mxu0 %v663
        %v1160 = vpop.f32.mrf.mxu0
        %v1161 = vadd.f32 0.0, %v1160
        %v1162 = vpop.f32.mrf.mxu0
        %v1163 = vadd.f32 0.0, %v1162
        %1164 = vmatmul.bf16.gmra.mxu0 %v666
        %v1165 = vpop.f32.mrf.mxu0
        %v1166 = vadd.f32 0.0, %v1165
        %v1167 = vpop.f32.mrf.mxu0
        %v1168 = vadd.f32 0.0, %v1167
        %1169 = vmatmul.bf16.gmra.mxu0 %v669
        %v1170 = vpop.f32.mrf.mxu0
        %v1171 = vadd.f32 0.0, %v1170
        %v1172 = vpop.f32.mrf.mxu0
        %v1173 = vadd.f32 0.0, %v1172
        %1174 = vmatmul.bf16.gmra.mxu0 %v672
        %v1175 = vpop.f32.mrf.mxu0
        %v1176 = vadd.f32 0.0, %v1175
        %v1177 = vpop.f32.mrf.mxu0
        %v1178 = vadd.f32 0.0, %v1177
        %1179 = vmatmul.bf16.gmra.mxu0 %v1131
        %v1180 = vpop.f32.mrf.mxu0
        %v1181 = vadd.f32 0.0, %v1180
        %v1182 = vpop.f32.mrf.mxu0
        %v1183 = vadd.f32 0.0, %v1182
        %1184 = vdwg.mxu0
        %v1185 = vadd.f32 %v1109, %v1146
        %v1186 = vadd.f32 %v1110, %v1148
        %v1187 = vadd.f32 %v1111, %v1151
        %v1188 = vadd.f32 %v1112, %v1153
        %v1189 = vadd.f32 %v1113, %v1156
        %v1190 = vadd.f32 %v1114, %v1158
        %v1191 = vadd.f32 %v1115, %v1161
        %v1192 = vadd.f32 %v1116, %v1163
        %v1193 = vadd.f32 %v1117, %v1166
        %v1194 = vadd.f32 %v1118, %v1168
        %v1195 = vadd.f32 %v1119, %v1171
        %v1196 = vadd.f32 %v1120, %v1173
        %v1197 = vadd.f32 %v1121, %v1176
        %v1198 = vadd.f32 %v1122, %v1178
        %v1199 = vadd.f32 %v1123, %v1181
        %v1200 = vadd.f32 %v1124, %v1183
        %1201 = vst [vmem:[#allocation2] sm:$0xff] %v1185
        %1202 = vst [vmem:[#allocation2 + $0x8] sm:$0xff] %v1186
        %1203 = vst [vmem:[#allocation2 + $0x10] sm:$0xff] %v1187
        %1204 = vst [vmem:[#allocation2 + $0x18] sm:$0xff] %v1188
        %1205 = vst [vmem:[#allocation2 + $0x20] sm:$0xff] %v1189
        %1206 = vst [vmem:[#allocation2 + $0x28] sm:$0xff] %v1190
        %1207 = vst [vmem:[#allocation2 + $0x30] sm:$0xff] %v1191
        %1208 = vst [vmem:[#allocation2 + $0x38] sm:$0xff] %v1192
        %1209 = vst [vmem:[#allocation2 + $0x40] sm:$0xff] %v1193
        %1210 = vst [vmem:[#allocation2 + $0x48] sm:$0xff] %v1194
        %1211 = vst [vmem:[#allocation2 + $0x50] sm:$0xff] %v1195
        %1212 = vst [vmem:[#allocation2 + $0x58] sm:$0xff] %v1196
        %1213 = vst [vmem:[#allocation2 + $0x60] sm:$0xff] %v1197
        %1214 = vst [vmem:[#allocation2 + $0x68] sm:$0xff] %v1198
        %1215 = vst [vmem:[#allocation2 + $0x70] sm:$0xff] %v1199
        %1216 = vst [vmem:[#allocation2 + $0x78] sm:$0xff] %v1200
        %v1218 = vrot.slane %v240, 5
        %v1219 = vrot.slane %v1218, 4
        %v1220 = vrot.slane %v241, 5
        %v1221 = vsel %vm768, %v1219, %v1220
        %v1222 = vrot.slane %v1220, 4
        %v1223 = vrot.slane %v242, 5
        %v1224 = vsel %vm768, %v1222, %v1223
        %v1225 = vld [vmem:[#allocation2] sm:$0xff]
        %v1226 = vld [vmem:[#allocation2 + $0x8] sm:$0xff]
        %v1227 = vld [vmem:[#allocation2 + $0x10] sm:$0xff]
        %v1228 = vld [vmem:[#allocation2 + $0x18] sm:$0xff]
        %v1229 = vld [vmem:[#allocation2 + $0x20] sm:$0xff]
        %v1230 = vld [vmem:[#allocation2 + $0x28] sm:$0xff]
        %v1231 = vld [vmem:[#allocation2 + $0x30] sm:$0xff]
        %v1232 = vld [vmem:[#allocation2 + $0x38] sm:$0xff]
        %v1233 = vld [vmem:[#allocation2 + $0x40] sm:$0xff]
        %v1234 = vld [vmem:[#allocation2 + $0x48] sm:$0xff]
        %v1235 = vld [vmem:[#allocation2 + $0x50] sm:$0xff]
        %v1236 = vld [vmem:[#allocation2 + $0x58] sm:$0xff]
        %v1237 = vld [vmem:[#allocation2 + $0x60] sm:$0xff]
        %v1238 = vld [vmem:[#allocation2 + $0x68] sm:$0xff]
        %v1239 = vld [vmem:[#allocation2 + $0x70] sm:$0xff]
        %v1240 = vld [vmem:[#allocation2 + $0x78] sm:$0xff]
        %s1241 = scalar_lea.vmem %s1, 10
        %v1242 = vld [vmem:[%s1241] sm:$0x3]
        %v1243 = vunpack.c.l.b16 %v1221
        %v1244 = vunpack.c.l.b16 %v1224
        %v1245 = vpack.c.b16 %v1244, %v1243
        %v1247 = vsel %vm303, %v1245, 0
        %v1250 = vsel %vm328, %v1242, 0
        %1252 = vmatpush.bf16.msra.mxu0 0
        %1253 = vmatpush.bf16.msra.mxu0 0
        %1254 = vmatpush.bf16.msra.mxu0 0
        %1255 = vmatpush.bf16.msra.mxu0 0
        %1256 = vmatpush.bf16.msra.mxu0 0
        %1257 = vmatpush.bf16.msra.mxu0 0
        %1258 = vmatpush.bf16.msra.mxu0 0
        %1259 = vmatpush.bf16.msra.mxu0 %v1250
        %1260 = vmatmul.bf16.gmra.mxu0 %v871
        %v1261 = vpop.f32.mrf.mxu0
        %v1262 = vadd.f32 0.0, %v1261
        %v1263 = vpop.f32.mrf.mxu0
        %v1264 = vadd.f32 0.0, %v1263
        %1265 = vmatmul.bf16.gmra.mxu0 %v874
        %v1266 = vpop.f32.mrf.mxu0
        %v1267 = vadd.f32 0.0, %v1266
        %v1268 = vpop.f32.mrf.mxu0
        %v1269 = vadd.f32 0.0, %v1268
        %1270 = vmatmul.bf16.gmra.mxu0 %v877
        %v1271 = vpop.f32.mrf.mxu0
        %v1272 = vadd.f32 0.0, %v1271
        %v1273 = vpop.f32.mrf.mxu0
        %v1274 = vadd.f32 0.0, %v1273
        %1275 = vmatmul.bf16.gmra.mxu0 %v880
        %v1276 = vpop.f32.mrf.mxu0
        %v1277 = vadd.f32 0.0, %v1276
        %v1278 = vpop.f32.mrf.mxu0
        %v1279 = vadd.f32 0.0, %v1278
        %1280 = vmatmul.bf16.gmra.mxu0 %v883
        %v1281 = vpop.f32.mrf.mxu0
        %v1282 = vadd.f32 0.0, %v1281
        %v1283 = vpop.f32.mrf.mxu0
        %v1284 = vadd.f32 0.0, %v1283
        %1285 = vmatmul.bf16.gmra.mxu0 %v886
        %v1286 = vpop.f32.mrf.mxu0
        %v1287 = vadd.f32 0.0, %v1286
        %v1288 = vpop.f32.mrf.mxu0
        %v1289 = vadd.f32 0.0, %v1288
        %1290 = vmatmul.bf16.gmra.mxu0 %v889
        %v1291 = vpop.f32.mrf.mxu0
        %v1292 = vadd.f32 0.0, %v1291
        %v1293 = vpop.f32.mrf.mxu0
        %v1294 = vadd.f32 0.0, %v1293
        %1295 = vmatmul.bf16.gmra.mxu0 %v1247
        %v1296 = vpop.f32.mrf.mxu0
        %v1297 = vadd.f32 0.0, %v1296
        %v1298 = vpop.f32.mrf.mxu0
        %v1299 = vadd.f32 0.0, %v1298
        %1300 = vdwg.mxu0
        %v1301 = vadd.f32 %v1225, %v1262
        %v1302 = vadd.f32 %v1226, %v1264
        %v1303 = vadd.f32 %v1227, %v1267
        %v1304 = vadd.f32 %v1228, %v1269
        %v1305 = vadd.f32 %v1229, %v1272
        %v1306 = vadd.f32 %v1230, %v1274
        %v1307 = vadd.f32 %v1231, %v1277
        %v1308 = vadd.f32 %v1232, %v1279
        %v1309 = vadd.f32 %v1233, %v1282
        %v1310 = vadd.f32 %v1234, %v1284
        %v1311 = vadd.f32 %v1235, %v1287
        %v1312 = vadd.f32 %v1236, %v1289
        %v1313 = vadd.f32 %v1237, %v1292
        %v1314 = vadd.f32 %v1238, %v1294
        %v1315 = vadd.f32 %v1239, %v1297
        %v1316 = vadd.f32 %v1240, %v1299
        %1317 = vst [vmem:[#allocation2] sm:$0xff] %v1301
        %1318 = vst [vmem:[#allocation2 + $0x8] sm:$0xff] %v1302
        %1319 = vst [vmem:[#allocation2 + $0x10] sm:$0xff] %v1303
        %1320 = vst [vmem:[#allocation2 + $0x18] sm:$0xff] %v1304
        %1321 = vst [vmem:[#allocation2 + $0x20] sm:$0xff] %v1305
        %1322 = vst [vmem:[#allocation2 + $0x28] sm:$0xff] %v1306
        %1323 = vst [vmem:[#allocation2 + $0x30] sm:$0xff] %v1307
        %1324 = vst [vmem:[#allocation2 + $0x38] sm:$0xff] %v1308
        %1325 = vst [vmem:[#allocation2 + $0x40] sm:$0xff] %v1309
        %1326 = vst [vmem:[#allocation2 + $0x48] sm:$0xff] %v1310
        %1327 = vst [vmem:[#allocation2 + $0x50] sm:$0xff] %v1311
        %1328 = vst [vmem:[#allocation2 + $0x58] sm:$0xff] %v1312
        %1329 = vst [vmem:[#allocation2 + $0x60] sm:$0xff] %v1313
        %1330 = vst [vmem:[#allocation2 + $0x68] sm:$0xff] %v1314
        %1331 = vst [vmem:[#allocation2 + $0x70] sm:$0xff] %v1315
        %1332 = vst [vmem:[#allocation2 + $0x78] sm:$0xff] %v1316
        %v1333 = vld [vmem:[#allocation2] sm:$0xff]
        %v1334 = vld [vmem:[#allocation2 + $0x8] sm:$0xff]
        %v1335 = vld [vmem:[#allocation2 + $0x10] sm:$0xff]
        %v1336 = vld [vmem:[#allocation2 + $0x18] sm:$0xff]
        %v1337 = vld [vmem:[#allocation2 + $0x20] sm:$0xff]
        %v1338 = vld [vmem:[#allocation2 + $0x28] sm:$0xff]
        %v1339 = vld [vmem:[#allocation2 + $0x30] sm:$0xff]
        %v1340 = vld [vmem:[#allocation2 + $0x38] sm:$0xff]
        %v1341 = vld [vmem:[#allocation2 + $0x40] sm:$0xff]
        %v1342 = vld [vmem:[#allocation2 + $0x48] sm:$0xff]
        %v1343 = vld [vmem:[#allocation2 + $0x50] sm:$0xff]
        %v1344 = vld [vmem:[#allocation2 + $0x58] sm:$0xff]
        %v1345 = vld [vmem:[#allocation2 + $0x60] sm:$0xff]
        %v1346 = vld [vmem:[#allocation2 + $0x68] sm:$0xff]
        %v1347 = vld [vmem:[#allocation2 + $0x70] sm:$0xff]
        %v1348 = vld [vmem:[#allocation2 + $0x78] sm:$0xff]
        %s1349 = scalar_lea.vmem %s1, 12
        %v1350 = vld [vmem:[%s1349] sm:$0x3]
        %v1353 = vunpack.c.l.b16 %v243
        %v1354 = vunpack.c.l.b16 %v244
        %v1355 = vpack.c.b16 %v1354, %v1353
        %v1357 = vsel %vm303, %v1355, 0
        %v1360 = vsel %vm328, %v1350, 0
        %1362 = vmatpush.bf16.msra.mxu0 0
        %1363 = vmatpush.bf16.msra.mxu0 0
        %1364 = vmatpush.bf16.msra.mxu0 0
        %1365 = vmatpush.bf16.msra.mxu0 0
        %1366 = vmatpush.bf16.msra.mxu0 0
        %1367 = vmatpush.bf16.msra.mxu0 0
        %1368 = vmatpush.bf16.msra.mxu0 0
        %1369 = vmatpush.bf16.msra.mxu0 %v1360
        %1370 = vmatmul.bf16.gmra.mxu0 %v311
        %v1371 = vpop.f32.mrf.mxu0
        %v1372 = vadd.f32 0.0, %v1371
        %v1373 = vpop.f32.mrf.mxu0
        %v1374 = vadd.f32 0.0, %v1373
        %1375 = vmatmul.bf16.gmra.mxu0 %v314
        %v1376 = vpop.f32.mrf.mxu0
        %v1377 = vadd.f32 0.0, %v1376
        %v1378 = vpop.f32.mrf.mxu0
        %v1379 = vadd.f32 0.0, %v1378
        %1380 = vmatmul.bf16.gmra.mxu0 %v317
        %v1381 = vpop.f32.mrf.mxu0
        %v1382 = vadd.f32 0.0, %v1381
        %v1383 = vpop.f32.mrf.mxu0
        %v1384 = vadd.f32 0.0, %v1383
        %1385 = vmatmul.bf16.gmra.mxu0 %v320
        %v1386 = vpop.f32.mrf.mxu0
        %v1387 = vadd.f32 0.0, %v1386
        %v1388 = vpop.f32.mrf.mxu0
        %v1389 = vadd.f32 0.0, %v1388
        %1390 = vmatmul.bf16.gmra.mxu0 %v323
        %v1391 = vpop.f32.mrf.mxu0
        %v1392 = vadd.f32 0.0, %v1391
        %v1393 = vpop.f32.mrf.mxu0
        %v1394 = vadd.f32 0.0, %v1393
        %1395 = vmatmul.bf16.gmra.mxu0 %v326
        %v1396 = vpop.f32.mrf.mxu0
        %v1397 = vadd.f32 0.0, %v1396
        %v1398 = vpop.f32.mrf.mxu0
        %v1399 = vadd.f32 0.0, %v1398
        %1400 = vmatmul.bf16.gmra.mxu0 %v999
        %v1401 = vpop.f32.mrf.mxu0
        %v1402 = vadd.f32 0.0, %v1401
        %v1403 = vpop.f32.mrf.mxu0
        %v1404 = vadd.f32 0.0, %v1403
        %1405 = vmatmul.bf16.gmra.mxu0 %v1357
        %v1406 = vpop.f32.mrf.mxu0
        %v1407 = vadd.f32 0.0, %v1406
        %v1408 = vpop.f32.mrf.mxu0
        %v1409 = vadd.f32 0.0, %v1408
        %1410 = vdwg.mxu0
        %v1411 = vadd.f32 %v1333, %v1372
        %v1412 = vadd.f32 %v1334, %v1374
        %v1413 = vadd.f32 %v1335, %v1377
        %v1414 = vadd.f32 %v1336, %v1379
        %v1415 = vadd.f32 %v1337, %v1382
        %v1416 = vadd.f32 %v1338, %v1384
        %v1417 = vadd.f32 %v1339, %v1387
        %v1418 = vadd.f32 %v1340, %v1389
        %v1419 = vadd.f32 %v1341, %v1392
        %v1420 = vadd.f32 %v1342, %v1394
        %v1421 = vadd.f32 %v1343, %v1397
        %v1422 = vadd.f32 %v1344, %v1399
        %v1423 = vadd.f32 %v1345, %v1402
        %v1424 = vadd.f32 %v1346, %v1404
        %v1425 = vadd.f32 %v1347, %v1407
        %v1426 = vadd.f32 %v1348, %v1409
        %1427 = vst [vmem:[#allocation2] sm:$0xff] %v1411
        %1428 = vst [vmem:[#allocation2 + $0x8] sm:$0xff] %v1412
        %1429 = vst [vmem:[#allocation2 + $0x10] sm:$0xff] %v1413
        %1430 = vst [vmem:[#allocation2 + $0x18] sm:$0xff] %v1414
        %1431 = vst [vmem:[#allocation2 + $0x20] sm:$0xff] %v1415
        %1432 = vst [vmem:[#allocation2 + $0x28] sm:$0xff] %v1416
        %1433 = vst [vmem:[#allocation2 + $0x30] sm:$0xff] %v1417
        %1434 = vst [vmem:[#allocation2 + $0x38] sm:$0xff] %v1418
        %1435 = vst [vmem:[#allocation2 + $0x40] sm:$0xff] %v1419
        %1436 = vst [vmem:[#allocation2 + $0x48] sm:$0xff] %v1420
        %1437 = vst [vmem:[#allocation2 + $0x50] sm:$0xff] %v1421
        %1438 = vst [vmem:[#allocation2 + $0x58] sm:$0xff] %v1422
        %1439 = vst [vmem:[#allocation2 + $0x60] sm:$0xff] %v1423
        %1440 = vst [vmem:[#allocation2 + $0x68] sm:$0xff] %v1424
        %1441 = vst [vmem:[#allocation2 + $0x70] sm:$0xff] %v1425
        %1442 = vst [vmem:[#allocation2 + $0x78] sm:$0xff] %v1426
        %v1444 = vshrl.u32 %v243, 16
        %v1446 = vrot.slane %v1444, 4
        %v1447 = vshll.u32 %v243, 16
        %v1449 = vrot.slane %v1447, 5
        %v1450 = vor.u32 %v1446, %v1449
        %v1451 = vrot.slane %v1450, 4
        %v1453 = vshll.u32 %v244, 16
        %v1455 = vrot.slane %v1453, 5
        %v1456 = vsel %vm415, %v1451, %v1455
        %v1457 = vshrl.u32 %v244, 16
        %v1459 = vrot.slane %v1457, 4
        %v1460 = vor.u32 %v1459, %v1455
        %v1461 = vrot.slane %v1460, 4
        %v1463 = vshll.u32 %v245, 16
        %v1465 = vrot.slane %v1463, 5
        %v1466 = vsel %vm415, %v1461, %v1465
        %v1467 = vld [vmem:[#allocation2] sm:$0xff]
        %v1468 = vld [vmem:[#allocation2 + $0x8] sm:$0xff]
        %v1469 = vld [vmem:[#allocation2 + $0x10] sm:$0xff]
        %v1470 = vld [vmem:[#allocation2 + $0x18] sm:$0xff]
        %v1471 = vld [vmem:[#allocation2 + $0x20] sm:$0xff]
        %v1472 = vld [vmem:[#allocation2 + $0x28] sm:$0xff]
        %v1473 = vld [vmem:[#allocation2 + $0x30] sm:$0xff]
        %v1474 = vld [vmem:[#allocation2 + $0x38] sm:$0xff]
        %v1475 = vld [vmem:[#allocation2 + $0x40] sm:$0xff]
        %v1476 = vld [vmem:[#allocation2 + $0x48] sm:$0xff]
        %v1477 = vld [vmem:[#allocation2 + $0x50] sm:$0xff]
        %v1478 = vld [vmem:[#allocation2 + $0x58] sm:$0xff]
        %v1479 = vld [vmem:[#allocation2 + $0x60] sm:$0xff]
        %v1480 = vld [vmem:[#allocation2 + $0x68] sm:$0xff]
        %v1481 = vld [vmem:[#allocation2 + $0x70] sm:$0xff]
        %v1482 = vld [vmem:[#allocation2 + $0x78] sm:$0xff]
        %s1483 = scalar_lea.vmem %s1, 14
        %v1484 = vld [vmem:[%s1483] sm:$0x3]
        %v1485 = vunpack.c.l.b16 %v1456
        %v1486 = vunpack.c.l.b16 %v1466
        %v1487 = vpack.c.b16 %v1486, %v1485
        %v1489 = vsel %vm303, %v1487, 0
        %v1492 = vsel %vm328, %v1484, 0
        %1494 = vmatpush.bf16.msra.mxu0 0
        %1495 = vmatpush.bf16.msra.mxu0 0
        %1496 = vmatpush.bf16.msra.mxu0 0
        %1497 = vmatpush.bf16.msra.mxu0 0
        %1498 = vmatpush.bf16.msra.mxu0 0
        %1499 = vmatpush.bf16.msra.mxu0 0
        %1500 = vmatpush.bf16.msra.mxu0 0
        %1501 = vmatpush.bf16.msra.mxu0 %v1492
        %1502 = vmatmul.bf16.gmra.mxu0 %v657
        %v1503 = vpop.f32.mrf.mxu0
        %v1504 = vadd.f32 0.0, %v1503
        %v1505 = vpop.f32.mrf.mxu0
        %v1506 = vadd.f32 0.0, %v1505
        %1507 = vmatmul.bf16.gmra.mxu0 %v660
        %v1508 = vpop.f32.mrf.mxu0
        %v1509 = vadd.f32 0.0, %v1508
        %v1510 = vpop.f32.mrf.mxu0
        %v1511 = vadd.f32 0.0, %v1510
        %1512 = vmatmul.bf16.gmra.mxu0 %v663
        %v1513 = vpop.f32.mrf.mxu0
        %v1514 = vadd.f32 0.0, %v1513
        %v1515 = vpop.f32.mrf.mxu0
        %v1516 = vadd.f32 0.0, %v1515
        %1517 = vmatmul.bf16.gmra.mxu0 %v666
        %v1518 = vpop.f32.mrf.mxu0
        %v1519 = vadd.f32 0.0, %v1518
        %v1520 = vpop.f32.mrf.mxu0
        %v1521 = vadd.f32 0.0, %v1520
        %1522 = vmatmul.bf16.gmra.mxu0 %v669
        %v1523 = vpop.f32.mrf.mxu0
        %v1524 = vadd.f32 0.0, %v1523
        %v1525 = vpop.f32.mrf.mxu0
        %v1526 = vadd.f32 0.0, %v1525
        %1527 = vmatmul.bf16.gmra.mxu0 %v672
        %v1528 = vpop.f32.mrf.mxu0
        %v1529 = vadd.f32 0.0, %v1528
        %v1530 = vpop.f32.mrf.mxu0
        %v1531 = vadd.f32 0.0, %v1530
        %1532 = vmatmul.bf16.gmra.mxu0 %v1131
        %v1533 = vpop.f32.mrf.mxu0
        %v1534 = vadd.f32 0.0, %v1533
        %v1535 = vpop.f32.mrf.mxu0
        %v1536 = vadd.f32 0.0, %v1535
        %1537 = vmatmul.bf16.gmra.mxu0 %v1489
        %v1538 = vpop.f32.mrf.mxu0
        %v1539 = vadd.f32 0.0, %v1538
        %v1540 = vpop.f32.mrf.mxu0
        %v1541 = vadd.f32 0.0, %v1540
        %1542 = vdwg.mxu0
        %v1543 = vadd.f32 %v1467, %v1504
        %v1544 = vadd.f32 %v1468, %v1506
        %v1545 = vadd.f32 %v1469, %v1509
        %v1546 = vadd.f32 %v1470, %v1511
        %v1547 = vadd.f32 %v1471, %v1514
        %v1548 = vadd.f32 %v1472, %v1516
        %v1549 = vadd.f32 %v1473, %v1519
        %v1550 = vadd.f32 %v1474, %v1521
        %v1551 = vadd.f32 %v1475, %v1524
        %v1552 = vadd.f32 %v1476, %v1526
        %v1553 = vadd.f32 %v1477, %v1529
        %v1554 = vadd.f32 %v1478, %v1531
        %v1555 = vadd.f32 %v1479, %v1534
        %v1556 = vadd.f32 %v1480, %v1536
        %v1557 = vadd.f32 %v1481, %v1539
        %v1558 = vadd.f32 %v1482, %v1541
        %1559 = vst [vmem:[#allocation2] sm:$0xff] %v1543
        %1560 = vst [vmem:[#allocation2 + $0x8] sm:$0xff] %v1544
        %1561 = vst [vmem:[#allocation2 + $0x10] sm:$0xff] %v1545
        %1562 = vst [vmem:[#allocation2 + $0x18] sm:$0xff] %v1546
        %1563 = vst [vmem:[#allocation2 + $0x20] sm:$0xff] %v1547
        %1564 = vst [vmem:[#allocation2 + $0x28] sm:$0xff] %v1548
        %1565 = vst [vmem:[#allocation2 + $0x30] sm:$0xff] %v1549
        %1566 = vst [vmem:[#allocation2 + $0x38] sm:$0xff] %v1550
        %1567 = vst [vmem:[#allocation2 + $0x40] sm:$0xff] %v1551
        %1568 = vst [vmem:[#allocation2 + $0x48] sm:$0xff] %v1552
        %1569 = vst [vmem:[#allocation2 + $0x50] sm:$0xff] %v1553
        %1570 = vst [vmem:[#allocation2 + $0x58] sm:$0xff] %v1554
        %1571 = vst [vmem:[#allocation2 + $0x60] sm:$0xff] %v1555
        %1572 = vst [vmem:[#allocation2 + $0x68] sm:$0xff] %v1556
        %1573 = vst [vmem:[#allocation2 + $0x70] sm:$0xff] %v1557
        %1574 = vst [vmem:[#allocation2 + $0x78] sm:$0xff] %v1558
        %v1576 = vrot.slane %v243, 5
        %v1577 = vrot.slane %v1576, 4
        %v1578 = vrot.slane %v244, 5
        %v1579 = vsel %vm768, %v1577, %v1578
        %v1580 = vrot.slane %v1578, 4
        %v1581 = vrot.slane %v245, 5
        %v1582 = vsel %vm768, %v1580, %v1581
        %v1583 = vld [vmem:[#allocation2] sm:$0xff]
        %v1584 = vld [vmem:[#allocation2 + $0x8] sm:$0xff]
        %v1585 = vld [vmem:[#allocation2 + $0x10] sm:$0xff]
        %v1586 = vld [vmem:[#allocation2 + $0x18] sm:$0xff]
        %v1587 = vld [vmem:[#allocation2 + $0x20] sm:$0xff]
        %v1588 = vld [vmem:[#allocation2 + $0x28] sm:$0xff]
        %v1589 = vld [vmem:[#allocation2 + $0x30] sm:$0xff]
        %v1590 = vld [vmem:[#allocation2 + $0x38] sm:$0xff]
        %v1591 = vld [vmem:[#allocation2 + $0x40] sm:$0xff]
        %v1592 = vld [vmem:[#allocation2 + $0x48] sm:$0xff]
        %v1593 = vld [vmem:[#allocation2 + $0x50] sm:$0xff]
        %v1594 = vld [vmem:[#allocation2 + $0x58] sm:$0xff]
        %v1595 = vld [vmem:[#allocation2 + $0x60] sm:$0xff]
        %v1596 = vld [vmem:[#allocation2 + $0x68] sm:$0xff]
        %v1597 = vld [vmem:[#allocation2 + $0x70] sm:$0xff]
        %v1598 = vld [vmem:[#allocation2 + $0x78] sm:$0xff]
        %s1599 = scalar_lea.vmem %s1, 16
        %v1600 = vld [vmem:[%s1599] sm:$0x3]
        %v1601 = vunpack.c.l.b16 %v1579
        %v1602 = vunpack.c.l.b16 %v1582
        %v1603 = vpack.c.b16 %v1602, %v1601
        %v1605 = vsel %vm303, %v1603, 0
        %v1608 = vsel %vm328, %v1600, 0
        %1610 = vmatpush.bf16.msra.mxu0 0
        %1611 = vmatpush.bf16.msra.mxu0 0
        %1612 = vmatpush.bf16.msra.mxu0 0
        %1613 = vmatpush.bf16.msra.mxu0 0
        %1614 = vmatpush.bf16.msra.mxu0 0
        %1615 = vmatpush.bf16.msra.mxu0 0
        %1616 = vmatpush.bf16.msra.mxu0 0
        %1617 = vmatpush.bf16.msra.mxu0 %v1608
        %1618 = vmatmul.bf16.gmra.mxu0 %v874
        %v1619 = vpop.f32.mrf.mxu0
        %v1620 = vadd.f32 0.0, %v1619
        %v1621 = vpop.f32.mrf.mxu0
        %v1622 = vadd.f32 0.0, %v1621
        %1623 = vmatmul.bf16.gmra.mxu0 %v877
        %v1624 = vpop.f32.mrf.mxu0
        %v1625 = vadd.f32 0.0, %v1624
        %v1626 = vpop.f32.mrf.mxu0
        %v1627 = vadd.f32 0.0, %v1626
        %1628 = vmatmul.bf16.gmra.mxu0 %v880
        %v1629 = vpop.f32.mrf.mxu0
        %v1630 = vadd.f32 0.0, %v1629
        %v1631 = vpop.f32.mrf.mxu0
        %v1632 = vadd.f32 0.0, %v1631
        %1633 = vmatmul.bf16.gmra.mxu0 %v883
        %v1634 = vpop.f32.mrf.mxu0
        %v1635 = vadd.f32 0.0, %v1634
        %v1636 = vpop.f32.mrf.mxu0
        %v1637 = vadd.f32 0.0, %v1636
        %1638 = vmatmul.bf16.gmra.mxu0 %v886
        %v1639 = vpop.f32.mrf.mxu0
        %v1640 = vadd.f32 0.0, %v1639
        %v1641 = vpop.f32.mrf.mxu0
        %v1642 = vadd.f32 0.0, %v1641
        %1643 = vmatmul.bf16.gmra.mxu0 %v889
        %v1644 = vpop.f32.mrf.mxu0
        %v1645 = vadd.f32 0.0, %v1644
        %v1646 = vpop.f32.mrf.mxu0
        %v1647 = vadd.f32 0.0, %v1646
        %1648 = vmatmul.bf16.gmra.mxu0 %v1247
        %v1649 = vpop.f32.mrf.mxu0
        %v1650 = vadd.f32 0.0, %v1649
        %v1651 = vpop.f32.mrf.mxu0
        %v1652 = vadd.f32 0.0, %v1651
        %1653 = vmatmul.bf16.gmra.mxu0 %v1605
        %v1654 = vpop.f32.mrf.mxu0
        %v1655 = vadd.f32 0.0, %v1654
        %v1656 = vpop.f32.mrf.mxu0
        %v1657 = vadd.f32 0.0, %v1656
        %1658 = vdwg.mxu0
        %v1659 = vadd.f32 %v1583, %v1620
        %v1660 = vadd.f32 %v1584, %v1622
        %v1661 = vadd.f32 %v1585, %v1625
        %v1662 = vadd.f32 %v1586, %v1627
        %v1663 = vadd.f32 %v1587, %v1630
        %v1664 = vadd.f32 %v1588, %v1632
        %v1665 = vadd.f32 %v1589, %v1635
        %v1666 = vadd.f32 %v1590, %v1637
        %v1667 = vadd.f32 %v1591, %v1640
        %v1668 = vadd.f32 %v1592, %v1642
        %v1669 = vadd.f32 %v1593, %v1645
        %v1670 = vadd.f32 %v1594, %v1647
        %v1671 = vadd.f32 %v1595, %v1650
        %v1672 = vadd.f32 %v1596, %v1652
        %v1673 = vadd.f32 %v1597, %v1655
        %v1674 = vadd.f32 %v1598, %v1657
        %1675 = vst [vmem:[#allocation2] sm:$0xff] %v1659
        %1676 = vst [vmem:[#allocation2 + $0x8] sm:$0xff] %v1660
        %1677 = vst [vmem:[#allocation2 + $0x10] sm:$0xff] %v1661
        %1678 = vst [vmem:[#allocation2 + $0x18] sm:$0xff] %v1662
        %1679 = vst [vmem:[#allocation2 + $0x20] sm:$0xff] %v1663
        %1680 = vst [vmem:[#allocation2 + $0x28] sm:$0xff] %v1664
        %1681 = vst [vmem:[#allocation2 + $0x30] sm:$0xff] %v1665
        %1682 = vst [vmem:[#allocation2 + $0x38] sm:$0xff] %v1666
        %1683 = vst [vmem:[#allocation2 + $0x40] sm:$0xff] %v1667
        %1684 = vst [vmem:[#allocation2 + $0x48] sm:$0xff] %v1668
        %1685 = vst [vmem:[#allocation2 + $0x50] sm:$0xff] %v1669
        %1686 = vst [vmem:[#allocation2 + $0x58] sm:$0xff] %v1670
        %1687 = vst [vmem:[#allocation2 + $0x60] sm:$0xff] %v1671
        %1688 = vst [vmem:[#allocation2 + $0x68] sm:$0xff] %v1672
        %1689 = vst [vmem:[#allocation2 + $0x70] sm:$0xff] %v1673
        %1690 = vst [vmem:[#allocation2 + $0x78] sm:$0xff] %v1674
        %v1691 = vld [vmem:[#allocation2] sm:$0xff]
        %v1692 = vld [vmem:[#allocation2 + $0x8] sm:$0xff]
        %v1693 = vld [vmem:[#allocation2 + $0x10] sm:$0xff]
        %v1694 = vld [vmem:[#allocation2 + $0x18] sm:$0xff]
        %v1695 = vld [vmem:[#allocation2 + $0x20] sm:$0xff]
        %v1696 = vld [vmem:[#allocation2 + $0x28] sm:$0xff]
        %v1697 = vld [vmem:[#allocation2 + $0x30] sm:$0xff]
        %v1698 = vld [vmem:[#allocation2 + $0x38] sm:$0xff]
        %v1699 = vld [vmem:[#allocation2 + $0x40] sm:$0xff]
        %v1700 = vld [vmem:[#allocation2 + $0x48] sm:$0xff]
        %v1701 = vld [vmem:[#allocation2 + $0x50] sm:$0xff]
        %v1702 = vld [vmem:[#allocation2 + $0x58] sm:$0xff]
        %v1703 = vld [vmem:[#allocation2 + $0x60] sm:$0xff]
        %v1704 = vld [vmem:[#allocation2 + $0x68] sm:$0xff]
        %v1705 = vld [vmem:[#allocation2 + $0x70] sm:$0xff]
        %v1706 = vld [vmem:[#allocation2 + $0x78] sm:$0xff]
        %v1707 = vld [vmem:[%s2] sm:$0x1]
        %v1709 = vperm.slane %v1707, 0
        %v1711 = vadd.f32 %v1691, %v1709
        %v1712 = vadd.f32 %v1692, %v1709
        %v1713 = vadd.f32 %v1693, %v1709
        %v1714 = vadd.f32 %v1694, %v1709
        %v1715 = vadd.f32 %v1695, %v1709
        %v1716 = vadd.f32 %v1696, %v1709
        %v1717 = vadd.f32 %v1697, %v1709
        %v1718 = vadd.f32 %v1698, %v1709
        %v1719 = vadd.f32 %v1699, %v1709
        %v1720 = vadd.f32 %v1700, %v1709
        %v1721 = vadd.f32 %v1701, %v1709
        %v1722 = vadd.f32 %v1702, %v1709
        %v1723 = vadd.f32 %v1703, %v1709
        %v1724 = vadd.f32 %v1704, %v1709
        %v1725 = vadd.f32 %v1705, %v1709
        %v1726 = vadd.f32 %v1706, %v1709
        %v1727 = vmax.f32 %v1711, 0.0
        %v1728 = vmax.f32 %v1712, 0.0
        %v1729 = vmax.f32 %v1713, 0.0
        %v1730 = vmax.f32 %v1714, 0.0
        %v1731 = vmax.f32 %v1715, 0.0
        %v1732 = vmax.f32 %v1716, 0.0
        %v1733 = vmax.f32 %v1717, 0.0
        %v1734 = vmax.f32 %v1718, 0.0
        %v1735 = vmax.f32 %v1719, 0.0
        %v1736 = vmax.f32 %v1720, 0.0
        %v1737 = vmax.f32 %v1721, 0.0
        %v1738 = vmax.f32 %v1722, 0.0
        %v1739 = vmax.f32 %v1723, 0.0
        %v1740 = vmax.f32 %v1724, 0.0
        %v1741 = vmax.f32 %v1725, 0.0
        %v1742 = vmax.f32 %v1726, 0.0
        %1743 = vst [vmem:[%s163] sm:$0xff] %v1727
        %1744 = vst [vmem:[%s163 + $0x8] sm:$0xff] %v1728
        %1745 = vst [vmem:[%s163 + $0x10] sm:$0xff] %v1729
        %1746 = vst [vmem:[%s163 + $0x18] sm:$0xff] %v1730
        %1747 = vst [vmem:[%s163 + $0x20] sm:$0xff] %v1731
        %1748 = vst [vmem:[%s163 + $0x28] sm:$0xff] %v1732
        %1749 = vst [vmem:[%s163 + $0x30] sm:$0xff] %v1733
        %1750 = vst [vmem:[%s163 + $0x38] sm:$0xff] %v1734
        %1751 = vst [vmem:[%s163 + $0x40] sm:$0xff] %v1735
        %1752 = vst [vmem:[%s163 + $0x48] sm:$0xff] %v1736
        %1753 = vst [vmem:[%s163 + $0x50] sm:$0xff] %v1737
        %1754 = vst [vmem:[%s163 + $0x58] sm:$0xff] %v1738
        %1755 = vst [vmem:[%s163 + $0x60] sm:$0xff] %v1739
        %1756 = vst [vmem:[%s163 + $0x68] sm:$0xff] %v1740
        %1757 = vst [vmem:[%s163 + $0x70] sm:$0xff] %v1741
        %1758 = vst [vmem:[%s163 + $0x78] sm:$0xff] %v1742
        %s1759 = sand.u32 %s93, 1
        %s1760 = scalar_lea.sflag [#allocation4], %s1759
        %s1761 = sand.u32 %s93, 1
        %s1762 = smul.addr %s1761, 128
        %s1763 = scalar_lea.vmem [#allocation3], %s1762
        // Predicated region
        $region33: #{tpu_custom_call.1} parent=31 // pred_check
          %p1764 = pneg %p103
        $region34: #{tpu_custom_call.1} parent=31 // pred_check_branch
          %1766 = sbr.rel (%p1764) target = $region36
        $region35: #{tpu_custom_call.1} parent=31 // pred_region
          %1768 = vsyncadd %s1760, 0
          %s1769 = smul.addr %s17, 16
          %s1770 = smul.addr %s1769, 8
          %s1771 = scalar_lea.hbm %s3, %s1770
          %s1772 = sshll.u32 %s1763, 4
          %s1773 = int_to_ptr.vmem [resolvable:$true] %s1772
          %s1774 = sshll.u32 %s1771, 4
          %s1775 = int_to_ptr.hbm [resolvable:$true] %s1774
          %1780 = dma.vmem_to_hbm [thread:$0]  %s1773, 2048, %s1775, %s1760, 128, 128, 8
        $region36: #{tpu_custom_call.1} parent=31 // pred_fallthru
          _
      $region32: #{tpu_custom_call.1} parent=5 // pred_fallthru
        _
      %p1781 = scmp.le.s32.totalorder 2, %s12
      // Predicated region
      $region37: #{tpu_custom_call.1} parent=5 // pred_check
        %p1782 = pneg %p1781
      $region38: #{tpu_custom_call.1} parent=5 // pred_check_branch
        %1784 = sbr.rel (%p1782) target = $region40
      $region39: #{tpu_custom_call.1} parent=5 // pred_region
        %s1785 = ssub.s32 %s12, 2
        // Predicated region
        $region41: #{tpu_custom_call.1} parent=39 // pred_check
          %p1786 = pneg %p109
        $region42: #{tpu_custom_call.1} parent=39 // pred_check_branch
          %1788 = sbr.rel (%p1786) target = $region44
        $region43: #{tpu_custom_call.1} parent=39 // pred_region
          %s1789 = sand.u32 %s94, 1
          %s1790 = scalar_lea.sflag [#allocation4], %s1789
          %s1791 = sand.u32 %s94, 1
          %s1792 = smul.addr %s1791, 128
          %s1793 = scalar_lea.vmem [#allocation3], %s1792
          %1795 = dma.done %s1790, 2048
        $region44: #{tpu_custom_call.1} parent=39 // pred_fallthru
          _
      $region40: #{tpu_custom_call.1} parent=5 // pred_fallthru
        _
    $region6: #{tpu_custom_call.1} parent=1 // loop_footer
      %s16 = sadd.s32 1, %s12
    $region7: #{tpu_custom_call.1} parent=1 // loop_footer_branch
      %11 = sbr.rel target = $region3
    $region8: #{tpu_custom_call.1} parent=1 // loop_exit
      _
    %1796 = vsyncpa [#allocation4], 1
    %s1797 = scalar_lea.sflag [#allocation4], 1
    %1798 = vsyncpa %s1797, 1

</llo_original>
